<compile_context>
chip_gen: v5e
topology: v5e:2x2
jax: 0.10.0
libtpu: 0.0.40
codegen_flags: <defaults>
</compile_context>

<pallas_src>
from functools import partial

import jax
import jax.numpy as jnp
from jax.experimental import pallas as pl
from jax.experimental.pallas import tpu as pltpu


# ----------------------------------------------------------------------------
# Fused kernel (no grid: everything resident in VMEM)
# ----------------------------------------------------------------------------
def make_fused_kernel(T, B_pad, H, num_layers):
    def kernel(*refs):
        # refs: x, (wih, whh, bias) * num_layers, fc_w, fc_b, out, hseq_scratch
        x_ref = refs[0]
        layer_refs = refs[1:1 + 3 * num_layers]
        fc_w_ref = refs[1 + 3 * num_layers]
        fc_b_ref = refs[2 + 3 * num_layers]
        out_ref = refs[3 + 3 * num_layers]
        hseq_sc = refs[4 + 3 * num_layers]          # VMEM (T*B_pad, H) scratch

        fc_w = fc_w_ref[...]                        # (H, O_pad) bf16
        fc_b = fc_b_ref[...]                        # (1, O_pad) f32

        layer_in = x_ref[...]                       # (T*B_pad, D_in) f32, time-major

        for layer in range(num_layers):
            wih = layer_refs[3 * layer][...]        # (D_in, 4H) bf16
            whh = layer_refs[3 * layer + 1][...]    # (H, 4H)    bf16
            bias = layer_refs[3 * layer + 2][...]   # (1, 4H)    f32
            last = layer == num_layers - 1

            # Hoisted (time-parallel) input projection: one bf16 MXU matmul
            # for all T timesteps, f32 accumulate.
            xp = jnp.dot(layer_in.astype(jnp.bfloat16), wih,
                         preferred_element_type=jnp.float32) + bias   # (T*B_pad, 4H)

            h = jnp.zeros((B_pad, H), jnp.float32)
            c = jnp.zeros((B_pad, H), jnp.float32)

            # Fully unrolled recurrence: only h @ W_hh (bf16, single MXU pass)
            # + elementwise gate math on the serial path. PyTorch gate order
            # (i, f, g, o); g columns were pre-scaled by 2 so that
            # tanh(x) = 2*sigmoid(2x) - 1 needs no second EUP pass.
            for t in range(T):
                row = t * B_pad                      # multiple of 8 -> aligned
                gates = xp[row:row + B_pad, :] + jnp.dot(
                    h.astype(jnp.bfloat16), whh,
                    preferred_element_type=jnp.float32)               # (B_pad, 4H)
                sig = jax.nn.sigmoid(gates)          # single full-width EUP pass
                i_g = sig[:, 0 * H:1 * H]
                f_g = sig[:, 1 * H:2 * H]
                g_g = 2.0 * sig[:, 2 * H:3 * H] - 1.0    # == tanh(unscaled gate)
                o_g = sig[:, 3 * H:4 * H]
                c = f_g * c + i_g * g_g
                h = o_g * jnp.tanh(c)
                if last:
                    # Fused (BN2-folded) Linear, per-step aligned (8, O_pad)
                    # lane-dense store; independent of next step -> overlaps.
                    out_ref[row:row + B_pad, :] = jnp.dot(
                        h.astype(jnp.bfloat16), fc_w,
                        preferred_element_type=jnp.float32) + fc_b
                else:
                    hseq_sc[row:row + B_pad, :] = h  # aligned (8, H) store

            if not last:
                layer_in = hseq_sc[...]              # (T*B_pad, H)
            # Inter-layer / post-LSTM dropout is identity in eval mode.

    return kernel


# ----------------------------------------------------------------------------
# One-time parameter preparation (BN folding, g-scaling, padding, bf16 cast)
# ----------------------------------------------------------------------------
def prepare_params(params):
    """Fold eval-mode BatchNorms into adjacent weights, pre-scale the g gate,
    pad the FC to a lane-dense 128 output, and cast matmul weights to bf16.
    Done ONCE, outside the inference path."""
    eps = 1e-5
    H = params["lstm"][0][1].shape[0]
    O = params["fc_w"].shape[1]
    O_pad = ((O + 127) // 128) * 128

    # BN1(input_size) -> layer-0 W_ih / bias
    s1 = params["bn1_gamma"] * jax.lax.rsqrt(params["bn1_var"] + eps)
    t1 = params["bn1_beta"] - params["bn1_mean"] * s1

    # g-gate (columns [2H,3H)) pre-scaled by 2 for tanh(x)=2*sigmoid(2x)-1
    gscale = jnp.ones((4 * H,), jnp.float32).at[2 * H:3 * H].set(2.0)

    lstm_weights = []
    for l, (wih, whh, b) in enumerate(params["lstm"]):
        if l == 0:
            b = b + t1 @ wih               # shift through W_ih into the bias
            wih = s1[:, None] * wih        # scale the D_in rows of W_ih
        wih = wih * gscale
        whh = whh * gscale
        b = b * gscale
        lstm_weights += [wih.astype(jnp.bfloat16),
                         whh.astype(jnp.bfloat16),
                         b[None, :].astype(jnp.float32)]

    # BN2(hidden_size) -> final Linear
    s2 = params["bn2_gamma"] * jax.lax.rsqrt(params["bn2_var"] + eps)
    t2 = params["bn2_beta"] - params["bn2_mean"] * s2
    fc_w = s2[:, None] * params["fc_w"]
    fc_b = params["fc_b"] + t2 @ params["fc_w"]
    fc_w = jnp.pad(fc_w, ((0, 0), (0, O_pad - O))).astype(jnp.bfloat16)
    fc_b = jnp.pad(fc_b, (0, O_pad - O))[None, :].astype(jnp.float32)

    return tuple(lstm_weights), fc_w, fc_b


# ----------------------------------------------------------------------------
# Forward wrapper: single pallas_call, minimal per-call layout work
# ----------------------------------------------------------------------------
@partial(jax.jit, static_argnames=("output_size",))
def lstm_model_forward(x_btd, lstm_weights, fc_w, fc_b, *, output_size):
    """x_btd: (B, T, input_size) -> (B, T, output_size). Eval-mode semantics."""
    B, T, D = x_btd.shape
    num_layers = len(lstm_weights) // 3
    H = lstm_weights[1].shape[0]
    O_pad = fc_w.shape[1]
    B_pad = ((B + 7) // 8) * 8          # pad batch to the 8-sublane tile

    # Time-major, batch padded to 8: rows [t*B_pad, (t+1)*B_pad) are timestep t,
    # so every per-step slice/store in the kernel is (8,128)-tile aligned.
    # Padded rows are zeros; they never mix with real rows (row-wise matmuls).
    x_t = jnp.transpose(x_btd.astype(jnp.float32), (1, 0, 2))       # (T, B, D)
    x_t = jnp.pad(x_t, ((0, 0), (0, B_pad - B), (0, 0)))            # (T, B_pad, D)
    x_flat = x_t.reshape(T * B_pad, D)

    kernel = make_fused_kernel(T, B_pad, H, num_layers)
    out_flat = pl.pallas_call(
        kernel,
        out_shape=jax.ShapeDtypeStruct((T * B_pad, O_pad), jnp.float32),
        scratch_shapes=[pltpu.VMEM((T * B_pad, H), jnp.float32)],
    )(x_flat, *lstm_weights, fc_w, fc_b)

    out = out_flat.reshape(T, B_pad, O_pad)[:, :B, :output_size]
    return jnp.transpose(out, (1, 0, 2))                             # (B, T, O)


# ----------------------------------------------------------------------------
# Parameter init (PyTorch-like distributions, eval-mode running stats)
# ----------------------------------------------------------------------------
def init_params(key, input_size, hidden_size, num_layers, output_size):
    ks = iter(jax.random.split(key, 8 + 4 * num_layers))
    p = {}

    p["bn1_gamma"] = jax.random.uniform(next(ks), (input_size,), jnp.float32, 0.5, 1.5)
    p["bn1_beta"] = jax.random.normal(next(ks), (input_size,), jnp.float32) * 0.1
    p["bn1_mean"] = jax.random.normal(next(ks), (input_size,), jnp.float32) * 0.1
    p["bn1_var"] = jax.random.uniform(next(ks), (input_size,), jnp.float32, 0.5, 1.5)

    bound = 1.0 / jnp.sqrt(hidden_size)
    p["lstm"] = []
    d_in = input_size
    for _ in range(num_layers):
        wih = jax.random.uniform(next(ks), (d_in, 4 * hidden_size), jnp.float32, -bound, bound)
        whh = jax.random.uniform(next(ks), (hidden_size, 4 * hidden_size), jnp.float32, -bound, bound)
        b_ih = jax.random.uniform(next(ks), (4 * hidden_size,), jnp.float32, -bound, bound)
        b_hh = jax.random.uniform(next(ks), (4 * hidden_size,), jnp.float32, -bound, bound)
        p["lstm"].append((wih, whh, b_ih + b_hh))
        d_in = hidden_size

    p["bn2_gamma"] = jax.random.uniform(next(ks), (hidden_size,), jnp.float32, 0.5, 1.5)
    p["bn2_beta"] = jax.random.normal(next(ks), (hidden_size,), jnp.float32) * 0.1
    p["bn2_mean"] = jax.random.normal(next(ks), (hidden_size,), jnp.float32) * 0.1
    p["bn2_var"] = jax.random.uniform(next(ks), (hidden_size,), jnp.float32, 0.5, 1.5)

    fb = 1.0 / jnp.sqrt(hidden_size)
    p["fc_w"] = jax.random.uniform(jax.random.fold_in(key, 1001),
                                   (hidden_size, output_size), jnp.float32, -fb, fb)
    p["fc_b"] = jax.random.uniform(jax.random.fold_in(key, 1002),
                                   (output_size,), jnp.float32, -fb, fb)
    return p


# ----------------------------------------------------------------------------
# Pure-JAX f32 reference (un-folded BN, explicit scan) for correctness check
# ----------------------------------------------------------------------------
def reference_forward(x_btd, params):
    eps = 1e-5
    x = x_btd.astype(jnp.float32)
    s1 = params["bn1_gamma"] / jnp.sqrt(params["bn1_var"] + eps)
    b1 = params["bn1_beta"] - params["bn1_mean"] * s1
    x = x * s1 + b1

    h_seq = jnp.transpose(x, (1, 0, 2))  # (T, B, D)
    for (wih, whh, bias) in params["lstm"]:
        B = h_seq.shape[1]
        H = whh.shape[0]

        def step(carry, x_t, wih=wih, whh=whh, bias=bias, H=H):
            h, c = carry
            gates = x_t @ wih + h @ whh + bias
            i_g = jax.nn.sigmoid(gates[:, 0 * H:1 * H])
            f_g = jax.nn.sigmoid(gates[:, 1 * H:2 * H])
            g_g = jnp.tanh(gates[:, 2 * H:3 * H])
            o_g = jax.nn.sigmoid(gates[:, 3 * H:4 * H])
            c = f_g * c + i_g * g_g
            h = o_g * jnp.tanh(c)
            return (h, c), h

        init = (jnp.zeros((B, H), jnp.float32), jnp.zeros((B, H), jnp.float32))
        _, h_seq = jax.lax.scan(step, init, h_seq)

    s2 = params["bn2_gamma"] / jnp.sqrt(params["bn2_var"] + eps)
    b2 = params["bn2_beta"] - params["bn2_mean"] * s2
    out = h_seq * s2 + b2
    out = out @ params["fc_w"] + params["fc_b"]
    return jnp.transpose(out, (1, 0, 2))


# ----------------------------------------------------------------------------
if __name__ == "__main__":
    INPUT_SIZE = 16
    HIDDEN_SIZE = 32
    NUM_LAYERS = 2
    OUTPUT_SIZE = 4
    BATCH = 2
    SEQ = 8

    key = jax.random.PRNGKey(0)
    k_x, k_p = jax.random.split(key)
    x = jax.random.normal(k_x, (BATCH, SEQ, INPUT_SIZE), jnp.float32)
    params = init_params(k_p, INPUT_SIZE, HIDDEN_SIZE, NUM_LAYERS, OUTPUT_SIZE)

    # TODO(synk): training-mode dropout / batch statistics are not implemented
    # (eval-mode semantics only, matching model.eval()).
    lstm_weights, fc_w, fc_b = prepare_params(params)   # one-time fold/pad/cast

    out = jax.block_until_ready(
        lstm_model_forward(x, lstm_weights, fc_w, fc_b, output_size=OUTPUT_SIZE))
    assert out.shape == (BATCH, SEQ, OUTPUT_SIZE), out.shape

    ref = jax.block_until_ready(reference_forward(x, params))
    max_err = float(jnp.max(jnp.abs(out - ref)))
    # bf16 MXU operands in the recurrence -> tolerance loosened vs. pure f32.
    assert jnp.allclose(out, ref, rtol=5e-2, atol=5e-2), max_err

    print("KERNEL_OK")
</pallas_src>

<mosaic_0001>
module attributes {stable_mosaic.version = 11 : i64} {
  func.func @kernel(%arg0: memref<64x16xf32, #tpu.memory_space<vmem>>, %arg1: memref<16x128xbf16, #tpu.memory_space<vmem>>, %arg2: memref<32x128xbf16, #tpu.memory_space<vmem>>, %arg3: memref<1x128xf32, #tpu.memory_space<vmem>>, %arg4: memref<32x128xbf16, #tpu.memory_space<vmem>>, %arg5: memref<32x128xbf16, #tpu.memory_space<vmem>>, %arg6: memref<1x128xf32, #tpu.memory_space<vmem>>, %arg7: memref<32x128xbf16, #tpu.memory_space<vmem>>, %arg8: memref<1x128xf32, #tpu.memory_space<vmem>>, %arg9: memref<64x128xf32, #tpu.memory_space<vmem>>, %arg10: memref<64x32xf32, #tpu.memory_space<vmem>>) attributes {dimension_semantics = [], scalar_prefetch = 0 : i64, scratch_operands = 1 : i64, tpu.core_type = #tpu.core_type<tc>} {
    %c0 = arith.constant 0 : index
    %c0_0 = arith.constant 0 : index
    %0 = vector.load %arg7[%c0, %c0_0] : memref<32x128xbf16, #tpu.memory_space<vmem>>, vector<32x128xbf16>
    %c0_1 = arith.constant 0 : index
    %c0_2 = arith.constant 0 : index
    %1 = vector.load %arg8[%c0_1, %c0_2] : memref<1x128xf32, #tpu.memory_space<vmem>>, vector<1x128xf32>
    %c0_3 = arith.constant 0 : index
    %c0_4 = arith.constant 0 : index
    %2 = vector.load %arg0[%c0_3, %c0_4] : memref<64x16xf32, #tpu.memory_space<vmem>>, vector<64x16xf32>
    %c0_5 = arith.constant 0 : index
    %c0_6 = arith.constant 0 : index
    %3 = vector.load %arg1[%c0_5, %c0_6] : memref<16x128xbf16, #tpu.memory_space<vmem>>, vector<16x128xbf16>
    %c0_7 = arith.constant 0 : index
    %c0_8 = arith.constant 0 : index
    %4 = vector.load %arg2[%c0_7, %c0_8] : memref<32x128xbf16, #tpu.memory_space<vmem>>, vector<32x128xbf16>
    %c0_9 = arith.constant 0 : index
    %c0_10 = arith.constant 0 : index
    %5 = vector.load %arg3[%c0_9, %c0_10] : memref<1x128xf32, #tpu.memory_space<vmem>>, vector<1x128xf32>
    %6 = arith.truncf %2 : vector<64x16xf32> to vector<64x16xbf16>
    %cst = arith.constant dense<0.000000e+00> : vector<64x128xf32>
    %7 = tpu.matmul %6, %3, %cst {dimension_numbers = #tpu.dot_dimension_numbers<[1], [0], [0], [1], [0, 0, 1, 1], [], []>} : vector<64x16xbf16>, vector<16x128xbf16>, vector<64x128xf32> -> vector<64x128xf32>
    %8 = vector.broadcast %5 : vector<1x128xf32> to vector<64x128xf32>
    %9 = arith.addf %7, %8 : vector<64x128xf32>
    %cst_11 = arith.constant 0.000000e+00 : f32
    %10 = vector.broadcast %cst_11 : f32 to vector<8x32xf32>
    %cst_12 = arith.constant 0.000000e+00 : f32
    %11 = vector.broadcast %cst_12 : f32 to vector<8x32xf32>
    %12 = vector.extract_strided_slice %9 {offsets = [0, 0], sizes = [8, 128], strides = [1, 1]} : vector<64x128xf32> to vector<8x128xf32>
    %13 = arith.truncf %10 : vector<8x32xf32> to vector<8x32xbf16>
    %cst_13 = arith.constant dense<0.000000e+00> : vector<8x128xf32>
    %14 = tpu.matmul %13, %4, %cst_13 {dimension_numbers = #tpu.dot_dimension_numbers<[1], [0], [0], [1], [0, 0, 1, 1], [], []>} : vector<8x32xbf16>, vector<32x128xbf16>, vector<8x128xf32> -> vector<8x128xf32>
    %15 = arith.addf %12, %14 : vector<8x128xf32>
    %16 = arith.negf %15 : vector<8x128xf32>
    %17 = math.exp %16 : vector<8x128xf32>
    %cst_14 = arith.constant 1.000000e+00 : f32
    %18 = vector.broadcast %cst_14 : f32 to vector<8x128xf32>
    %19 = arith.addf %18, %17 : vector<8x128xf32>
    %20 = arith.divf %18, %19 : vector<8x128xf32>
    %21 = vector.extract_strided_slice %20 {offsets = [0, 0], sizes = [8, 32], strides = [1, 1]} : vector<8x128xf32> to vector<8x32xf32>
    %22 = vector.extract_strided_slice %20 {offsets = [0, 32], sizes = [8, 32], strides = [1, 1]} : vector<8x128xf32> to vector<8x32xf32>
    %23 = vector.extract_strided_slice %20 {offsets = [0, 64], sizes = [8, 32], strides = [1, 1]} : vector<8x128xf32> to vector<8x32xf32>
    %cst_15 = arith.constant 2.000000e+00 : f32
    %24 = vector.broadcast %cst_15 : f32 to vector<8x32xf32>
    %25 = arith.mulf %24, %23 : vector<8x32xf32>
    %cst_16 = arith.constant 1.000000e+00 : f32
    %26 = vector.broadcast %cst_16 : f32 to vector<8x32xf32>
    %27 = arith.subf %25, %26 : vector<8x32xf32>
    %28 = vector.extract_strided_slice %20 {offsets = [0, 96], sizes = [8, 32], strides = [1, 1]} : vector<8x128xf32> to vector<8x32xf32>
    %29 = arith.mulf %22, %11 : vector<8x32xf32>
    %30 = arith.mulf %21, %27 : vector<8x32xf32>
    %31 = arith.addf %29, %30 : vector<8x32xf32>
    %32 = math.tanh %31 : vector<8x32xf32>
    %33 = arith.mulf %28, %32 : vector<8x32xf32>
    %c0_17 = arith.constant 0 : index
    %c0_18 = arith.constant 0 : index
    %34 = vector.load %arg10[%c0_17, %c0_18] : memref<64x32xf32, #tpu.memory_space<vmem>>, vector<8x32xf32>
    tpu.vector_store %arg10[%c0_17, %c0_18], %33 {strides = array<i32>} : memref<64x32xf32, #tpu.memory_space<vmem>>, vector<8x32xf32>,
    %35 = vector.extract_strided_slice %9 {offsets = [8, 0], sizes = [8, 128], strides = [1, 1]} : vector<64x128xf32> to vector<8x128xf32>
    %36 = arith.truncf %33 : vector<8x32xf32> to vector<8x32xbf16>
    %cst_19 = arith.constant dense<0.000000e+00> : vector<8x128xf32>
    %37 = tpu.matmul %36, %4, %cst_19 {dimension_numbers = #tpu.dot_dimension_numbers<[1], [0], [0], [1], [0, 0, 1, 1], [], []>} : vector<8x32xbf16>, vector<32x128xbf16>, vector<8x128xf32> -> vector<8x128xf32>
    %38 = arith.addf %35, %37 : vector<8x128xf32>
    %39 = arith.negf %38 : vector<8x128xf32>
    %40 = math.exp %39 : vector<8x128xf32>
    %cst_20 = arith.constant 1.000000e+00 : f32
    %41 = vector.broadcast %cst_20 : f32 to vector<8x128xf32>
    %42 = arith.addf %41, %40 : vector<8x128xf32>
    %43 = arith.divf %41, %42 : vector<8x128xf32>
    %44 = vector.extract_strided_slice %43 {offsets = [0, 0], sizes = [8, 32], strides = [1, 1]} : vector<8x128xf32> to vector<8x32xf32>
    %45 = vector.extract_strided_slice %43 {offsets = [0, 32], sizes = [8, 32], strides = [1, 1]} : vector<8x128xf32> to vector<8x32xf32>
    %46 = vector.extract_strided_slice %43 {offsets = [0, 64], sizes = [8, 32], strides = [1, 1]} : vector<8x128xf32> to vector<8x32xf32>
    %cst_21 = arith.constant 2.000000e+00 : f32
    %47 = vector.broadcast %cst_21 : f32 to vector<8x32xf32>
    %48 = arith.mulf %47, %46 : vector<8x32xf32>
    %cst_22 = arith.constant 1.000000e+00 : f32
    %49 = vector.broadcast %cst_22 : f32 to vector<8x32xf32>
    %50 = arith.subf %48, %49 : vector<8x32xf32>
    %51 = vector.extract_strided_slice %43 {offsets = [0, 96], sizes = [8, 32], strides = [1, 1]} : vector<8x128xf32> to vector<8x32xf32>
    %52 = arith.mulf %45, %31 : vector<8x32xf32>
    %53 = arith.mulf %44, %50 : vector<8x32xf32>
    %54 = arith.addf %52, %53 : vector<8x32xf32>
    %55 = math.tanh %54 : vector<8x32xf32>
    %56 = arith.mulf %51, %55 : vector<8x32xf32>
    %c8 = arith.constant 8 : index
    %c0_23 = arith.constant 0 : index
    %57 = vector.load %arg10[%c8, %c0_23] : memref<64x32xf32, #tpu.memory_space<vmem>>, vector<8x32xf32>
    tpu.vector_store %arg10[%c8, %c0_23], %56 {strides = array<i32>} : memref<64x32xf32, #tpu.memory_space<vmem>>, vector<8x32xf32>,
    %58 = vector.extract_strided_slice %9 {offsets = [16, 0], sizes = [8, 128], strides = [1, 1]} : vector<64x128xf32> to vector<8x128xf32>
    %59 = arith.truncf %56 : vector<8x32xf32> to vector<8x32xbf16>
    %cst_24 = arith.constant dense<0.000000e+00> : vector<8x128xf32>
    %60 = tpu.matmul %59, %4, %cst_24 {dimension_numbers = #tpu.dot_dimension_numbers<[1], [0], [0], [1], [0, 0, 1, 1], [], []>} : vector<8x32xbf16>, vector<32x128xbf16>, vector<8x128xf32> -> vector<8x128xf32>
    %61 = arith.addf %58, %60 : vector<8x128xf32>
    %62 = arith.negf %61 : vector<8x128xf32>
    %63 = math.exp %62 : vector<8x128xf32>
    %cst_25 = arith.constant 1.000000e+00 : f32
    %64 = vector.broadcast %cst_25 : f32 to vector<8x128xf32>
    %65 = arith.addf %64, %63 : vector<8x128xf32>
    %66 = arith.divf %64, %65 : vector<8x128xf32>
    %67 = vector.extract_strided_slice %66 {offsets = [0, 0], sizes = [8, 32], strides = [1, 1]} : vector<8x128xf32> to vector<8x32xf32>
    %68 = vector.extract_strided_slice %66 {offsets = [0, 32], sizes = [8, 32], strides = [1, 1]} : vector<8x128xf32> to vector<8x32xf32>
    %69 = vector.extract_strided_slice %66 {offsets = [0, 64], sizes = [8, 32], strides = [1, 1]} : vector<8x128xf32> to vector<8x32xf32>
    %cst_26 = arith.constant 2.000000e+00 : f32
    %70 = vector.broadcast %cst_26 : f32 to vector<8x32xf32>
    %71 = arith.mulf %70, %69 : vector<8x32xf32>
    %cst_27 = arith.constant 1.000000e+00 : f32
    %72 = vector.broadcast %cst_27 : f32 to vector<8x32xf32>
    %73 = arith.subf %71, %72 : vector<8x32xf32>
    %74 = vector.extract_strided_slice %66 {offsets = [0, 96], sizes = [8, 32], strides = [1, 1]} : vector<8x128xf32> to vector<8x32xf32>
    %75 = arith.mulf %68, %54 : vector<8x32xf32>
    %76 = arith.mulf %67, %73 : vector<8x32xf32>
    %77 = arith.addf %75, %76 : vector<8x32xf32>
    %78 = math.tanh %77 : vector<8x32xf32>
    %79 = arith.mulf %74, %78 : vector<8x32xf32>
    %c16 = arith.constant 16 : index
    %c0_28 = arith.constant 0 : index
    %80 = vector.load %arg10[%c16, %c0_28] : memref<64x32xf32, #tpu.memory_space<vmem>>, vector<8x32xf32>
    tpu.vector_store %arg10[%c16, %c0_28], %79 {strides = array<i32>} : memref<64x32xf32, #tpu.memory_space<vmem>>, vector<8x32xf32>,
    %81 = vector.extract_strided_slice %9 {offsets = [24, 0], sizes = [8, 128], strides = [1, 1]} : vector<64x128xf32> to vector<8x128xf32>
    %82 = arith.truncf %79 : vector<8x32xf32> to vector<8x32xbf16>
    %cst_29 = arith.constant dense<0.000000e+00> : vector<8x128xf32>
    %83 = tpu.matmul %82, %4, %cst_29 {dimension_numbers = #tpu.dot_dimension_numbers<[1], [0], [0], [1], [0, 0, 1, 1], [], []>} : vector<8x32xbf16>, vector<32x128xbf16>, vector<8x128xf32> -> vector<8x128xf32>
    %84 = arith.addf %81, %83 : vector<8x128xf32>
    %85 = arith.negf %84 : vector<8x128xf32>
    %86 = math.exp %85 : vector<8x128xf32>
    %cst_30 = arith.constant 1.000000e+00 : f32
    %87 = vector.broadcast %cst_30 : f32 to vector<8x128xf32>
    %88 = arith.addf %87, %86 : vector<8x128xf32>
    %89 = arith.divf %87, %88 : vector<8x128xf32>
    %90 = vector.extract_strided_slice %89 {offsets = [0, 0], sizes = [8, 32], strides = [1, 1]} : vector<8x128xf32> to vector<8x32xf32>
    %91 = vector.extract_strided_slice %89 {offsets = [0, 32], sizes = [8, 32], strides = [1, 1]} : vector<8x128xf32> to vector<8x32xf32>
    %92 = vector.extract_strided_slice %89 {offsets = [0, 64], sizes = [8, 32], strides = [1, 1]} : vector<8x128xf32> to vector<8x32xf32>
    %cst_31 = arith.constant 2.000000e+00 : f32
    %93 = vector.broadcast %cst_31 : f32 to vector<8x32xf32>
    %94 = arith.mulf %93, %92 : vector<8x32xf32>
    %cst_32 = arith.constant 1.000000e+00 : f32
    %95 = vector.broadcast %cst_32 : f32 to vector<8x32xf32>
    %96 = arith.subf %94, %95 : vector<8x32xf32>
    %97 = vector.extract_strided_slice %89 {offsets = [0, 96], sizes = [8, 32], strides = [1, 1]} : vector<8x128xf32> to vector<8x32xf32>
    %98 = arith.mulf %91, %77 : vector<8x32xf32>
    %99 = arith.mulf %90, %96 : vector<8x32xf32>
    %100 = arith.addf %98, %99 : vector<8x32xf32>
    %101 = math.tanh %100 : vector<8x32xf32>
    %102 = arith.mulf %97, %101 : vector<8x32xf32>
    %c24 = arith.constant 24 : index
    %c0_33 = arith.constant 0 : index
    %103 = vector.load %arg10[%c24, %c0_33] : memref<64x32xf32, #tpu.memory_space<vmem>>, vector<8x32xf32>
    tpu.vector_store %arg10[%c24, %c0_33], %102 {strides = array<i32>} : memref<64x32xf32, #tpu.memory_space<vmem>>, vector<8x32xf32>,
    %104 = vector.extract_strided_slice %9 {offsets = [32, 0], sizes = [8, 128], strides = [1, 1]} : vector<64x128xf32> to vector<8x128xf32>
    %105 = arith.truncf %102 : vector<8x32xf32> to vector<8x32xbf16>
    %cst_34 = arith.constant dense<0.000000e+00> : vector<8x128xf32>
    %106 = tpu.matmul %105, %4, %cst_34 {dimension_numbers = #tpu.dot_dimension_numbers<[1], [0], [0], [1], [0, 0, 1, 1], [], []>} : vector<8x32xbf16>, vector<32x128xbf16>, vector<8x128xf32> -> vector<8x128xf32>
    %107 = arith.addf %104, %106 : vector<8x128xf32>
    %108 = arith.negf %107 : vector<8x128xf32>
    %109 = math.exp %108 : vector<8x128xf32>
    %cst_35 = arith.constant 1.000000e+00 : f32
    %110 = vector.broadcast %cst_35 : f32 to vector<8x128xf32>
    %111 = arith.addf %110, %109 : vector<8x128xf32>
    %112 = arith.divf %110, %111 : vector<8x128xf32>
    %113 = vector.extract_strided_slice %112 {offsets = [0, 0], sizes = [8, 32], strides = [1, 1]} : vector<8x128xf32> to vector<8x32xf32>
    %114 = vector.extract_strided_slice %112 {offsets = [0, 32], sizes = [8, 32], strides = [1, 1]} : vector<8x128xf32> to vector<8x32xf32>
    %115 = vector.extract_strided_slice %112 {offsets = [0, 64], sizes = [8, 32], strides = [1, 1]} : vector<8x128xf32> to vector<8x32xf32>
    %cst_36 = arith.constant 2.000000e+00 : f32
    %116 = vector.broadcast %cst_36 : f32 to vector<8x32xf32>
    %117 = arith.mulf %116, %115 : vector<8x32xf32>
    %cst_37 = arith.constant 1.000000e+00 : f32
    %118 = vector.broadcast %cst_37 : f32 to vector<8x32xf32>
    %119 = arith.subf %117, %118 : vector<8x32xf32>
    %120 = vector.extract_strided_slice %112 {offsets = [0, 96], sizes = [8, 32], strides = [1, 1]} : vector<8x128xf32> to vector<8x32xf32>
    %121 = arith.mulf %114, %100 : vector<8x32xf32>
    %122 = arith.mulf %113, %119 : vector<8x32xf32>
    %123 = arith.addf %121, %122 : vector<8x32xf32>
    %124 = math.tanh %123 : vector<8x32xf32>
    %125 = arith.mulf %120, %124 : vector<8x32xf32>
    %c32 = arith.constant 32 : index
    %c0_38 = arith.constant 0 : index
    %126 = vector.load %arg10[%c32, %c0_38] : memref<64x32xf32, #tpu.memory_space<vmem>>, vector<8x32xf32>
    tpu.vector_store %arg10[%c32, %c0_38], %125 {strides = array<i32>} : memref<64x32xf32, #tpu.memory_space<vmem>>, vector<8x32xf32>,
    %127 = vector.extract_strided_slice %9 {offsets = [40, 0], sizes = [8, 128], strides = [1, 1]} : vector<64x128xf32> to vector<8x128xf32>
    %128 = arith.truncf %125 : vector<8x32xf32> to vector<8x32xbf16>
    %cst_39 = arith.constant dense<0.000000e+00> : vector<8x128xf32>
    %129 = tpu.matmul %128, %4, %cst_39 {dimension_numbers = #tpu.dot_dimension_numbers<[1], [0], [0], [1], [0, 0, 1, 1], [], []>} : vector<8x32xbf16>, vector<32x128xbf16>, vector<8x128xf32> -> vector<8x128xf32>
    %130 = arith.addf %127, %129 : vector<8x128xf32>
    %131 = arith.negf %130 : vector<8x128xf32>
    %132 = math.exp %131 : vector<8x128xf32>
    %cst_40 = arith.constant 1.000000e+00 : f32
    %133 = vector.broadcast %cst_40 : f32 to vector<8x128xf32>
    %134 = arith.addf %133, %132 : vector<8x128xf32>
    %135 = arith.divf %133, %134 : vector<8x128xf32>
    %136 = vector.extract_strided_slice %135 {offsets = [0, 0], sizes = [8, 32], strides = [1, 1]} : vector<8x128xf32> to vector<8x32xf32>
    %137 = vector.extract_strided_slice %135 {offsets = [0, 32], sizes = [8, 32], strides = [1, 1]} : vector<8x128xf32> to vector<8x32xf32>
    %138 = vector.extract_strided_slice %135 {offsets = [0, 64], sizes = [8, 32], strides = [1, 1]} : vector<8x128xf32> to vector<8x32xf32>
    %cst_41 = arith.constant 2.000000e+00 : f32
    %139 = vector.broadcast %cst_41 : f32 to vector<8x32xf32>
    %140 = arith.mulf %139, %138 : vector<8x32xf32>
    %cst_42 = arith.constant 1.000000e+00 : f32
    %141 = vector.broadcast %cst_42 : f32 to vector<8x32xf32>
    %142 = arith.subf %140, %141 : vector<8x32xf32>
    %143 = vector.extract_strided_slice %135 {offsets = [0, 96], sizes = [8, 32], strides = [1, 1]} : vector<8x128xf32> to vector<8x32xf32>
    %144 = arith.mulf %137, %123 : vector<8x32xf32>
    %145 = arith.mulf %136, %142 : vector<8x32xf32>
    %146 = arith.addf %144, %145 : vector<8x32xf32>
    %147 = math.tanh %146 : vector<8x32xf32>
    %148 = arith.mulf %143, %147 : vector<8x32xf32>
    %c40 = arith.constant 40 : index
    %c0_43 = arith.constant 0 : index
    %149 = vector.load %arg10[%c40, %c0_43] : memref<64x32xf32, #tpu.memory_space<vmem>>, vector<8x32xf32>
    tpu.vector_store %arg10[%c40, %c0_43], %148 {strides = array<i32>} : memref<64x32xf32, #tpu.memory_space<vmem>>, vector<8x32xf32>,
    %150 = vector.extract_strided_slice %9 {offsets = [48, 0], sizes = [8, 128], strides = [1, 1]} : vector<64x128xf32> to vector<8x128xf32>
    %151 = arith.truncf %148 : vector<8x32xf32> to vector<8x32xbf16>
    %cst_44 = arith.constant dense<0.000000e+00> : vector<8x128xf32>
    %152 = tpu.matmul %151, %4, %cst_44 {dimension_numbers = #tpu.dot_dimension_numbers<[1], [0], [0], [1], [0, 0, 1, 1], [], []>} : vector<8x32xbf16>, vector<32x128xbf16>, vector<8x128xf32> -> vector<8x128xf32>
    %153 = arith.addf %150, %152 : vector<8x128xf32>
    %154 = arith.negf %153 : vector<8x128xf32>
    %155 = math.exp %154 : vector<8x128xf32>
    %cst_45 = arith.constant 1.000000e+00 : f32
    %156 = vector.broadcast %cst_45 : f32 to vector<8x128xf32>
    %157 = arith.addf %156, %155 : vector<8x128xf32>
    %158 = arith.divf %156, %157 : vector<8x128xf32>
    %159 = vector.extract_strided_slice %158 {offsets = [0, 0], sizes = [8, 32], strides = [1, 1]} : vector<8x128xf32> to vector<8x32xf32>
    %160 = vector.extract_strided_slice %158 {offsets = [0, 32], sizes = [8, 32], strides = [1, 1]} : vector<8x128xf32> to vector<8x32xf32>
    %161 = vector.extract_strided_slice %158 {offsets = [0, 64], sizes = [8, 32], strides = [1, 1]} : vector<8x128xf32> to vector<8x32xf32>
    %cst_46 = arith.constant 2.000000e+00 : f32
    %162 = vector.broadcast %cst_46 : f32 to vector<8x32xf32>
    %163 = arith.mulf %162, %161 : vector<8x32xf32>
    %cst_47 = arith.constant 1.000000e+00 : f32
    %164 = vector.broadcast %cst_47 : f32 to vector<8x32xf32>
    %165 = arith.subf %163, %164 : vector<8x32xf32>
    %166 = vector.extract_strided_slice %158 {offsets = [0, 96], sizes = [8, 32], strides = [1, 1]} : vector<8x128xf32> to vector<8x32xf32>
    %167 = arith.mulf %160, %146 : vector<8x32xf32>
    %168 = arith.mulf %159, %165 : vector<8x32xf32>
    %169 = arith.addf %167, %168 : vector<8x32xf32>
    %170 = math.tanh %169 : vector<8x32xf32>
    %171 = arith.mulf %166, %170 : vector<8x32xf32>
    %c48 = arith.constant 48 : index
    %c0_48 = arith.constant 0 : index
    %172 = vector.load %arg10[%c48, %c0_48] : memref<64x32xf32, #tpu.memory_space<vmem>>, vector<8x32xf32>
    tpu.vector_store %arg10[%c48, %c0_48], %171 {strides = array<i32>} : memref<64x32xf32, #tpu.memory_space<vmem>>, vector<8x32xf32>,
    %173 = vector.extract_strided_slice %9 {offsets = [56, 0], sizes = [8, 128], strides = [1, 1]} : vector<64x128xf32> to vector<8x128xf32>
    %174 = arith.truncf %171 : vector<8x32xf32> to vector<8x32xbf16>
    %cst_49 = arith.constant dense<0.000000e+00> : vector<8x128xf32>
    %175 = tpu.matmul %174, %4, %cst_49 {dimension_numbers = #tpu.dot_dimension_numbers<[1], [0], [0], [1], [0, 0, 1, 1], [], []>} : vector<8x32xbf16>, vector<32x128xbf16>, vector<8x128xf32> -> vector<8x128xf32>
    %176 = arith.addf %173, %175 : vector<8x128xf32>
    %177 = arith.negf %176 : vector<8x128xf32>
    %178 = math.exp %177 : vector<8x128xf32>
    %cst_50 = arith.constant 1.000000e+00 : f32
    %179 = vector.broadcast %cst_50 : f32 to vector<8x128xf32>
    %180 = arith.addf %179, %178 : vector<8x128xf32>
    %181 = arith.divf %179, %180 : vector<8x128xf32>
    %182 = vector.extract_strided_slice %181 {offsets = [0, 0], sizes = [8, 32], strides = [1, 1]} : vector<8x128xf32> to vector<8x32xf32>
    %183 = vector.extract_strided_slice %181 {offsets = [0, 32], sizes = [8, 32], strides = [1, 1]} : vector<8x128xf32> to vector<8x32xf32>
    %184 = vector.extract_strided_slice %181 {offsets = [0, 64], sizes = [8, 32], strides = [1, 1]} : vector<8x128xf32> to vector<8x32xf32>
    %cst_51 = arith.constant 2.000000e+00 : f32
    %185 = vector.broadcast %cst_51 : f32 to vector<8x32xf32>
    %186 = arith.mulf %185, %184 : vector<8x32xf32>
    %cst_52 = arith.constant 1.000000e+00 : f32
    %187 = vector.broadcast %cst_52 : f32 to vector<8x32xf32>
    %188 = arith.subf %186, %187 : vector<8x32xf32>
    %189 = vector.extract_strided_slice %181 {offsets = [0, 96], sizes = [8, 32], strides = [1, 1]} : vector<8x128xf32> to vector<8x32xf32>
    %190 = arith.mulf %183, %169 : vector<8x32xf32>
    %191 = arith.mulf %182, %188 : vector<8x32xf32>
    %192 = arith.addf %190, %191 : vector<8x32xf32>
    %193 = math.tanh %192 : vector<8x32xf32>
    %194 = arith.mulf %189, %193 : vector<8x32xf32>
    %c56 = arith.constant 56 : index
    %c0_53 = arith.constant 0 : index
    %195 = vector.load %arg10[%c56, %c0_53] : memref<64x32xf32, #tpu.memory_space<vmem>>, vector<8x32xf32>
    tpu.vector_store %arg10[%c56, %c0_53], %194 {strides = array<i32>} : memref<64x32xf32, #tpu.memory_space<vmem>>, vector<8x32xf32>,
    %c0_54 = arith.constant 0 : index
    %c0_55 = arith.constant 0 : index
    %196 = vector.load %arg10[%c0_54, %c0_55] : memref<64x32xf32, #tpu.memory_space<vmem>>, vector<64x32xf32>
    %c0_56 = arith.constant 0 : index
    %c0_57 = arith.constant 0 : index
    %197 = vector.load %arg4[%c0_56, %c0_57] : memref<32x128xbf16, #tpu.memory_space<vmem>>, vector<32x128xbf16>
    %c0_58 = arith.constant 0 : index
    %c0_59 = arith.constant 0 : index
    %198 = vector.load %arg5[%c0_58, %c0_59] : memref<32x128xbf16, #tpu.memory_space<vmem>>, vector<32x128xbf16>
    %c0_60 = arith.constant 0 : index
    %c0_61 = arith.constant 0 : index
    %199 = vector.load %arg6[%c0_60, %c0_61] : memref<1x128xf32, #tpu.memory_space<vmem>>, vector<1x128xf32>
    %200 = arith.truncf %196 : vector<64x32xf32> to vector<64x32xbf16>
    %cst_62 = arith.constant dense<0.000000e+00> : vector<64x128xf32>
    %201 = tpu.matmul %200, %197, %cst_62 {dimension_numbers = #tpu.dot_dimension_numbers<[1], [0], [0], [1], [0, 0, 1, 1], [], []>} : vector<64x32xbf16>, vector<32x128xbf16>, vector<64x128xf32> -> vector<64x128xf32>
    %202 = vector.broadcast %199 : vector<1x128xf32> to vector<64x128xf32>
    %203 = arith.addf %201, %202 : vector<64x128xf32>
    %cst_63 = arith.constant 0.000000e+00 : f32
    %204 = vector.broadcast %cst_63 : f32 to vector<8x32xf32>
    %cst_64 = arith.constant 0.000000e+00 : f32
    %205 = vector.broadcast %cst_64 : f32 to vector<8x32xf32>
    %206 = vector.extract_strided_slice %203 {offsets = [0, 0], sizes = [8, 128], strides = [1, 1]} : vector<64x128xf32> to vector<8x128xf32>
    %207 = arith.truncf %204 : vector<8x32xf32> to vector<8x32xbf16>
    %cst_65 = arith.constant dense<0.000000e+00> : vector<8x128xf32>
    %208 = tpu.matmul %207, %198, %cst_65 {dimension_numbers = #tpu.dot_dimension_numbers<[1], [0], [0], [1], [0, 0, 1, 1], [], []>} : vector<8x32xbf16>, vector<32x128xbf16>, vector<8x128xf32> -> vector<8x128xf32>
    %209 = arith.addf %206, %208 : vector<8x128xf32>
    %210 = arith.negf %209 : vector<8x128xf32>
    %211 = math.exp %210 : vector<8x128xf32>
    %cst_66 = arith.constant 1.000000e+00 : f32
    %212 = vector.broadcast %cst_66 : f32 to vector<8x128xf32>
    %213 = arith.addf %212, %211 : vector<8x128xf32>
    %214 = arith.divf %212, %213 : vector<8x128xf32>
    %215 = vector.extract_strided_slice %214 {offsets = [0, 0], sizes = [8, 32], strides = [1, 1]} : vector<8x128xf32> to vector<8x32xf32>
    %216 = vector.extract_strided_slice %214 {offsets = [0, 32], sizes = [8, 32], strides = [1, 1]} : vector<8x128xf32> to vector<8x32xf32>
    %217 = vector.extract_strided_slice %214 {offsets = [0, 64], sizes = [8, 32], strides = [1, 1]} : vector<8x128xf32> to vector<8x32xf32>
    %cst_67 = arith.constant 2.000000e+00 : f32
    %218 = vector.broadcast %cst_67 : f32 to vector<8x32xf32>
    %219 = arith.mulf %218, %217 : vector<8x32xf32>
    %cst_68 = arith.constant 1.000000e+00 : f32
    %220 = vector.broadcast %cst_68 : f32 to vector<8x32xf32>
    %221 = arith.subf %219, %220 : vector<8x32xf32>
    %222 = vector.extract_strided_slice %214 {offsets = [0, 96], sizes = [8, 32], strides = [1, 1]} : vector<8x128xf32> to vector<8x32xf32>
    %223 = arith.mulf %216, %205 : vector<8x32xf32>
    %224 = arith.mulf %215, %221 : vector<8x32xf32>
    %225 = arith.addf %223, %224 : vector<8x32xf32>
    %226 = math.tanh %225 : vector<8x32xf32>
    %227 = arith.mulf %222, %226 : vector<8x32xf32>
    %228 = arith.truncf %227 : vector<8x32xf32> to vector<8x32xbf16>
    %cst_69 = arith.constant dense<0.000000e+00> : vector<8x128xf32>
    %229 = tpu.matmul %228, %0, %cst_69 {dimension_numbers = #tpu.dot_dimension_numbers<[1], [0], [0], [1], [0, 0, 1, 1], [], []>} : vector<8x32xbf16>, vector<32x128xbf16>, vector<8x128xf32> -> vector<8x128xf32>
    %230 = vector.broadcast %1 : vector<1x128xf32> to vector<8x128xf32>
    %231 = arith.addf %229, %230 : vector<8x128xf32>
    %c0_70 = arith.constant 0 : index
    %c0_71 = arith.constant 0 : index
    %232 = vector.load %arg9[%c0_70, %c0_71] : memref<64x128xf32, #tpu.memory_space<vmem>>, vector<8x128xf32>
    tpu.vector_store %arg9[%c0_70, %c0_71], %231 {strides = array<i32>} : memref<64x128xf32, #tpu.memory_space<vmem>>, vector<8x128xf32>,
    %233 = vector.extract_strided_slice %203 {offsets = [8, 0], sizes = [8, 128], strides = [1, 1]} : vector<64x128xf32> to vector<8x128xf32>
    %234 = arith.truncf %227 : vector<8x32xf32> to vector<8x32xbf16>
    %cst_72 = arith.constant dense<0.000000e+00> : vector<8x128xf32>
    %235 = tpu.matmul %234, %198, %cst_72 {dimension_numbers = #tpu.dot_dimension_numbers<[1], [0], [0], [1], [0, 0, 1, 1], [], []>} : vector<8x32xbf16>, vector<32x128xbf16>, vector<8x128xf32> -> vector<8x128xf32>
    %236 = arith.addf %233, %235 : vector<8x128xf32>
    %237 = arith.negf %236 : vector<8x128xf32>
    %238 = math.exp %237 : vector<8x128xf32>
    %cst_73 = arith.constant 1.000000e+00 : f32
    %239 = vector.broadcast %cst_73 : f32 to vector<8x128xf32>
    %240 = arith.addf %239, %238 : vector<8x128xf32>
    %241 = arith.divf %239, %240 : vector<8x128xf32>
    %242 = vector.extract_strided_slice %241 {offsets = [0, 0], sizes = [8, 32], strides = [1, 1]} : vector<8x128xf32> to vector<8x32xf32>
    %243 = vector.extract_strided_slice %241 {offsets = [0, 32], sizes = [8, 32], strides = [1, 1]} : vector<8x128xf32> to vector<8x32xf32>
    %244 = vector.extract_strided_slice %241 {offsets = [0, 64], sizes = [8, 32], strides = [1, 1]} : vector<8x128xf32> to vector<8x32xf32>
    %cst_74 = arith.constant 2.000000e+00 : f32
    %245 = vector.broadcast %cst_74 : f32 to vector<8x32xf32>
    %246 = arith.mulf %245, %244 : vector<8x32xf32>
    %cst_75 = arith.constant 1.000000e+00 : f32
    %247 = vector.broadcast %cst_75 : f32 to vector<8x32xf32>
    %248 = arith.subf %246, %247 : vector<8x32xf32>
    %249 = vector.extract_strided_slice %241 {offsets = [0, 96], sizes = [8, 32], strides = [1, 1]} : vector<8x128xf32> to vector<8x32xf32>
    %250 = arith.mulf %243, %225 : vector<8x32xf32>
    %251 = arith.mulf %242, %248 : vector<8x32xf32>
    %252 = arith.addf %250, %251 : vector<8x32xf32>
    %253 = math.tanh %252 : vector<8x32xf32>
    %254 = arith.mulf %249, %253 : vector<8x32xf32>
    %255 = arith.truncf %254 : vector<8x32xf32> to vector<8x32xbf16>
    %cst_76 = arith.constant dense<0.000000e+00> : vector<8x128xf32>
    %256 = tpu.matmul %255, %0, %cst_76 {dimension_numbers = #tpu.dot_dimension_numbers<[1], [0], [0], [1], [0, 0, 1, 1], [], []>} : vector<8x32xbf16>, vector<32x128xbf16>, vector<8x128xf32> -> vector<8x128xf32>
    %257 = vector.broadcast %1 : vector<1x128xf32> to vector<8x128xf32>
    %258 = arith.addf %256, %257 : vector<8x128xf32>
    %c8_77 = arith.constant 8 : index
    %c0_78 = arith.constant 0 : index
    %259 = vector.load %arg9[%c8_77, %c0_78] : memref<64x128xf32, #tpu.memory_space<vmem>>, vector<8x128xf32>
    tpu.vector_store %arg9[%c8_77, %c0_78], %258 {strides = array<i32>} : memref<64x128xf32, #tpu.memory_space<vmem>>, vector<8x128xf32>,
    %260 = vector.extract_strided_slice %203 {offsets = [16, 0], sizes = [8, 128], strides = [1, 1]} : vector<64x128xf32> to vector<8x128xf32>
    %261 = arith.truncf %254 : vector<8x32xf32> to vector<8x32xbf16>
    %cst_79 = arith.constant dense<0.000000e+00> : vector<8x128xf32>
    %262 = tpu.matmul %261, %198, %cst_79 {dimension_numbers = #tpu.dot_dimension_numbers<[1], [0], [0], [1], [0, 0, 1, 1], [], []>} : vector<8x32xbf16>, vector<32x128xbf16>, vector<8x128xf32> -> vector<8x128xf32>
    %263 = arith.addf %260, %262 : vector<8x128xf32>
    %264 = arith.negf %263 : vector<8x128xf32>
    %265 = math.exp %264 : vector<8x128xf32>
    %cst_80 = arith.constant 1.000000e+00 : f32
    %266 = vector.broadcast %cst_80 : f32 to vector<8x128xf32>
    %267 = arith.addf %266, %265 : vector<8x128xf32>
    %268 = arith.divf %266, %267 : vector<8x128xf32>
    %269 = vector.extract_strided_slice %268 {offsets = [0, 0], sizes = [8, 32], strides = [1, 1]} : vector<8x128xf32> to vector<8x32xf32>
    %270 = vector.extract_strided_slice %268 {offsets = [0, 32], sizes = [8, 32], strides = [1, 1]} : vector<8x128xf32> to vector<8x32xf32>
    %271 = vector.extract_strided_slice %268 {offsets = [0, 64], sizes = [8, 32], strides = [1, 1]} : vector<8x128xf32> to vector<8x32xf32>
    %cst_81 = arith.constant 2.000000e+00 : f32
    %272 = vector.broadcast %cst_81 : f32 to vector<8x32xf32>
    %273 = arith.mulf %272, %271 : vector<8x32xf32>
    %cst_82 = arith.constant 1.000000e+00 : f32
    %274 = vector.broadcast %cst_82 : f32 to vector<8x32xf32>
    %275 = arith.subf %273, %274 : vector<8x32xf32>
    %276 = vector.extract_strided_slice %268 {offsets = [0, 96], sizes = [8, 32], strides = [1, 1]} : vector<8x128xf32> to vector<8x32xf32>
    %277 = arith.mulf %270, %252 : vector<8x32xf32>
    %278 = arith.mulf %269, %275 : vector<8x32xf32>
    %279 = arith.addf %277, %278 : vector<8x32xf32>
    %280 = math.tanh %279 : vector<8x32xf32>
    %281 = arith.mulf %276, %280 : vector<8x32xf32>
    %282 = arith.truncf %281 : vector<8x32xf32> to vector<8x32xbf16>
    %cst_83 = arith.constant dense<0.000000e+00> : vector<8x128xf32>
    %283 = tpu.matmul %282, %0, %cst_83 {dimension_numbers = #tpu.dot_dimension_numbers<[1], [0], [0], [1], [0, 0, 1, 1], [], []>} : vector<8x32xbf16>, vector<32x128xbf16>, vector<8x128xf32> -> vector<8x128xf32>
    %284 = vector.broadcast %1 : vector<1x128xf32> to vector<8x128xf32>
    %285 = arith.addf %283, %284 : vector<8x128xf32>
    %c16_84 = arith.constant 16 : index
    %c0_85 = arith.constant 0 : index
    %286 = vector.load %arg9[%c16_84, %c0_85] : memref<64x128xf32, #tpu.memory_space<vmem>>, vector<8x128xf32>
    tpu.vector_store %arg9[%c16_84, %c0_85], %285 {strides = array<i32>} : memref<64x128xf32, #tpu.memory_space<vmem>>, vector<8x128xf32>,
    %287 = vector.extract_strided_slice %203 {offsets = [24, 0], sizes = [8, 128], strides = [1, 1]} : vector<64x128xf32> to vector<8x128xf32>
    %288 = arith.truncf %281 : vector<8x32xf32> to vector<8x32xbf16>
    %cst_86 = arith.constant dense<0.000000e+00> : vector<8x128xf32>
    %289 = tpu.matmul %288, %198, %cst_86 {dimension_numbers = #tpu.dot_dimension_numbers<[1], [0], [0], [1], [0, 0, 1, 1], [], []>} : vector<8x32xbf16>, vector<32x128xbf16>, vector<8x128xf32> -> vector<8x128xf32>
    %290 = arith.addf %287, %289 : vector<8x128xf32>
    %291 = arith.negf %290 : vector<8x128xf32>
    %292 = math.exp %291 : vector<8x128xf32>
    %cst_87 = arith.constant 1.000000e+00 : f32
    %293 = vector.broadcast %cst_87 : f32 to vector<8x128xf32>
    %294 = arith.addf %293, %292 : vector<8x128xf32>
    %295 = arith.divf %293, %294 : vector<8x128xf32>
    %296 = vector.extract_strided_slice %295 {offsets = [0, 0], sizes = [8, 32], strides = [1, 1]} : vector<8x128xf32> to vector<8x32xf32>
    %297 = vector.extract_strided_slice %295 {offsets = [0, 32], sizes = [8, 32], strides = [1, 1]} : vector<8x128xf32> to vector<8x32xf32>
    %298 = vector.extract_strided_slice %295 {offsets = [0, 64], sizes = [8, 32], strides = [1, 1]} : vector<8x128xf32> to vector<8x32xf32>
    %cst_88 = arith.constant 2.000000e+00 : f32
    %299 = vector.broadcast %cst_88 : f32 to vector<8x32xf32>
    %300 = arith.mulf %299, %298 : vector<8x32xf32>
    %cst_89 = arith.constant 1.000000e+00 : f32
    %301 = vector.broadcast %cst_89 : f32 to vector<8x32xf32>
    %302 = arith.subf %300, %301 : vector<8x32xf32>
    %303 = vector.extract_strided_slice %295 {offsets = [0, 96], sizes = [8, 32], strides = [1, 1]} : vector<8x128xf32> to vector<8x32xf32>
    %304 = arith.mulf %297, %279 : vector<8x32xf32>
    %305 = arith.mulf %296, %302 : vector<8x32xf32>
    %306 = arith.addf %304, %305 : vector<8x32xf32>
    %307 = math.tanh %306 : vector<8x32xf32>
    %308 = arith.mulf %303, %307 : vector<8x32xf32>
    %309 = arith.truncf %308 : vector<8x32xf32> to vector<8x32xbf16>
    %cst_90 = arith.constant dense<0.000000e+00> : vector<8x128xf32>
    %310 = tpu.matmul %309, %0, %cst_90 {dimension_numbers = #tpu.dot_dimension_numbers<[1], [0], [0], [1], [0, 0, 1, 1], [], []>} : vector<8x32xbf16>, vector<32x128xbf16>, vector<8x128xf32> -> vector<8x128xf32>
    %311 = vector.broadcast %1 : vector<1x128xf32> to vector<8x128xf32>
    %312 = arith.addf %310, %311 : vector<8x128xf32>
    %c24_91 = arith.constant 24 : index
    %c0_92 = arith.constant 0 : index
    %313 = vector.load %arg9[%c24_91, %c0_92] : memref<64x128xf32, #tpu.memory_space<vmem>>, vector<8x128xf32>
    tpu.vector_store %arg9[%c24_91, %c0_92], %312 {strides = array<i32>} : memref<64x128xf32, #tpu.memory_space<vmem>>, vector<8x128xf32>,
    %314 = vector.extract_strided_slice %203 {offsets = [32, 0], sizes = [8, 128], strides = [1, 1]} : vector<64x128xf32> to vector<8x128xf32>
    %315 = arith.truncf %308 : vector<8x32xf32> to vector<8x32xbf16>
    %cst_93 = arith.constant dense<0.000000e+00> : vector<8x128xf32>
    %316 = tpu.matmul %315, %198, %cst_93 {dimension_numbers = #tpu.dot_dimension_numbers<[1], [0], [0], [1], [0, 0, 1, 1], [], []>} : vector<8x32xbf16>, vector<32x128xbf16>, vector<8x128xf32> -> vector<8x128xf32>
    %317 = arith.addf %314, %316 : vector<8x128xf32>
    %318 = arith.negf %317 : vector<8x128xf32>
    %319 = math.exp %318 : vector<8x128xf32>
    %cst_94 = arith.constant 1.000000e+00 : f32
    %320 = vector.broadcast %cst_94 : f32 to vector<8x128xf32>
    %321 = arith.addf %320, %319 : vector<8x128xf32>
    %322 = arith.divf %320, %321 : vector<8x128xf32>
    %323 = vector.extract_strided_slice %322 {offsets = [0, 0], sizes = [8, 32], strides = [1, 1]} : vector<8x128xf32> to vector<8x32xf32>
    %324 = vector.extract_strided_slice %322 {offsets = [0, 32], sizes = [8, 32], strides = [1, 1]} : vector<8x128xf32> to vector<8x32xf32>
    %325 = vector.extract_strided_slice %322 {offsets = [0, 64], sizes = [8, 32], strides = [1, 1]} : vector<8x128xf32> to vector<8x32xf32>
    %cst_95 = arith.constant 2.000000e+00 : f32
    %326 = vector.broadcast %cst_95 : f32 to vector<8x32xf32>
    %327 = arith.mulf %326, %325 : vector<8x32xf32>
    %cst_96 = arith.constant 1.000000e+00 : f32
    %328 = vector.broadcast %cst_96 : f32 to vector<8x32xf32>
    %329 = arith.subf %327, %328 : vector<8x32xf32>
    %330 = vector.extract_strided_slice %322 {offsets = [0, 96], sizes = [8, 32], strides = [1, 1]} : vector<8x128xf32> to vector<8x32xf32>
    %331 = arith.mulf %324, %306 : vector<8x32xf32>
    %332 = arith.mulf %323, %329 : vector<8x32xf32>
    %333 = arith.addf %331, %332 : vector<8x32xf32>
    %334 = math.tanh %333 : vector<8x32xf32>
    %335 = arith.mulf %330, %334 : vector<8x32xf32>
    %336 = arith.truncf %335 : vector<8x32xf32> to vector<8x32xbf16>
    %cst_97 = arith.constant dense<0.000000e+00> : vector<8x128xf32>
    %337 = tpu.matmul %336, %0, %cst_97 {dimension_numbers = #tpu.dot_dimension_numbers<[1], [0], [0], [1], [0, 0, 1, 1], [], []>} : vector<8x32xbf16>, vector<32x128xbf16>, vector<8x128xf32> -> vector<8x128xf32>
    %338 = vector.broadcast %1 : vector<1x128xf32> to vector<8x128xf32>
    %339 = arith.addf %337, %338 : vector<8x128xf32>
    %c32_98 = arith.constant 32 : index
    %c0_99 = arith.constant 0 : index
    %340 = vector.load %arg9[%c32_98, %c0_99] : memref<64x128xf32, #tpu.memory_space<vmem>>, vector<8x128xf32>
    tpu.vector_store %arg9[%c32_98, %c0_99], %339 {strides = array<i32>} : memref<64x128xf32, #tpu.memory_space<vmem>>, vector<8x128xf32>,
    %341 = vector.extract_strided_slice %203 {offsets = [40, 0], sizes = [8, 128], strides = [1, 1]} : vector<64x128xf32> to vector<8x128xf32>
    %342 = arith.truncf %335 : vector<8x32xf32> to vector<8x32xbf16>
    %cst_100 = arith.constant dense<0.000000e+00> : vector<8x128xf32>
    %343 = tpu.matmul %342, %198, %cst_100 {dimension_numbers = #tpu.dot_dimension_numbers<[1], [0], [0], [1], [0, 0, 1, 1], [], []>} : vector<8x32xbf16>, vector<32x128xbf16>, vector<8x128xf32> -> vector<8x128xf32>
    %344 = arith.addf %341, %343 : vector<8x128xf32>
    %345 = arith.negf %344 : vector<8x128xf32>
    %346 = math.exp %345 : vector<8x128xf32>
    %cst_101 = arith.constant 1.000000e+00 : f32
    %347 = vector.broadcast %cst_101 : f32 to vector<8x128xf32>
    %348 = arith.addf %347, %346 : vector<8x128xf32>
    %349 = arith.divf %347, %348 : vector<8x128xf32>
    %350 = vector.extract_strided_slice %349 {offsets = [0, 0], sizes = [8, 32], strides = [1, 1]} : vector<8x128xf32> to vector<8x32xf32>
    %351 = vector.extract_strided_slice %349 {offsets = [0, 32], sizes = [8, 32], strides = [1, 1]} : vector<8x128xf32> to vector<8x32xf32>
    %352 = vector.extract_strided_slice %349 {offsets = [0, 64], sizes = [8, 32], strides = [1, 1]} : vector<8x128xf32> to vector<8x32xf32>
    %cst_102 = arith.constant 2.000000e+00 : f32
    %353 = vector.broadcast %cst_102 : f32 to vector<8x32xf32>
    %354 = arith.mulf %353, %352 : vector<8x32xf32>
    %cst_103 = arith.constant 1.000000e+00 : f32
    %355 = vector.broadcast %cst_103 : f32 to vector<8x32xf32>
    %356 = arith.subf %354, %355 : vector<8x32xf32>
    %357 = vector.extract_strided_slice %349 {offsets = [0, 96], sizes = [8, 32], strides = [1, 1]} : vector<8x128xf32> to vector<8x32xf32>
    %358 = arith.mulf %351, %333 : vector<8x32xf32>
    %359 = arith.mulf %350, %356 : vector<8x32xf32>
    %360 = arith.addf %358, %359 : vector<8x32xf32>
    %361 = math.tanh %360 : vector<8x32xf32>
    %362 = arith.mulf %357, %361 : vector<8x32xf32>
    %363 = arith.truncf %362 : vector<8x32xf32> to vector<8x32xbf16>
    %cst_104 = arith.constant dense<0.000000e+00> : vector<8x128xf32>
    %364 = tpu.matmul %363, %0, %cst_104 {dimension_numbers = #tpu.dot_dimension_numbers<[1], [0], [0], [1], [0, 0, 1, 1], [], []>} : vector<8x32xbf16>, vector<32x128xbf16>, vector<8x128xf32> -> vector<8x128xf32>
    %365 = vector.broadcast %1 : vector<1x128xf32> to vector<8x128xf32>
    %366 = arith.addf %364, %365 : vector<8x128xf32>
    %c40_105 = arith.constant 40 : index
    %c0_106 = arith.constant 0 : index
    %367 = vector.load %arg9[%c40_105, %c0_106] : memref<64x128xf32, #tpu.memory_space<vmem>>, vector<8x128xf32>
    tpu.vector_store %arg9[%c40_105, %c0_106], %366 {strides = array<i32>} : memref<64x128xf32, #tpu.memory_space<vmem>>, vector<8x128xf32>,
    %368 = vector.extract_strided_slice %203 {offsets = [48, 0], sizes = [8, 128], strides = [1, 1]} : vector<64x128xf32> to vector<8x128xf32>
    %369 = arith.truncf %362 : vector<8x32xf32> to vector<8x32xbf16>
    %cst_107 = arith.constant dense<0.000000e+00> : vector<8x128xf32>
    %370 = tpu.matmul %369, %198, %cst_107 {dimension_numbers = #tpu.dot_dimension_numbers<[1], [0], [0], [1], [0, 0, 1, 1], [], []>} : vector<8x32xbf16>, vector<32x128xbf16>, vector<8x128xf32> -> vector<8x128xf32>
    %371 = arith.addf %368, %370 : vector<8x128xf32>
    %372 = arith.negf %371 : vector<8x128xf32>
    %373 = math.exp %372 : vector<8x128xf32>
    %cst_108 = arith.constant 1.000000e+00 : f32
    %374 = vector.broadcast %cst_108 : f32 to vector<8x128xf32>
    %375 = arith.addf %374, %373 : vector<8x128xf32>
    %376 = arith.divf %374, %375 : vector<8x128xf32>
    %377 = vector.extract_strided_slice %376 {offsets = [0, 0], sizes = [8, 32], strides = [1, 1]} : vector<8x128xf32> to vector<8x32xf32>
    %378 = vector.extract_strided_slice %376 {offsets = [0, 32], sizes = [8, 32], strides = [1, 1]} : vector<8x128xf32> to vector<8x32xf32>
    %379 = vector.extract_strided_slice %376 {offsets = [0, 64], sizes = [8, 32], strides = [1, 1]} : vector<8x128xf32> to vector<8x32xf32>
    %cst_109 = arith.constant 2.000000e+00 : f32
    %380 = vector.broadcast %cst_109 : f32 to vector<8x32xf32>
    %381 = arith.mulf %380, %379 : vector<8x32xf32>
    %cst_110 = arith.constant 1.000000e+00 : f32
    %382 = vector.broadcast %cst_110 : f32 to vector<8x32xf32>
    %383 = arith.subf %381, %382 : vector<8x32xf32>
    %384 = vector.extract_strided_slice %376 {offsets = [0, 96], sizes = [8, 32], strides = [1, 1]} : vector<8x128xf32> to vector<8x32xf32>
    %385 = arith.mulf %378, %360 : vector<8x32xf32>
    %386 = arith.mulf %377, %383 : vector<8x32xf32>
    %387 = arith.addf %385, %386 : vector<8x32xf32>
    %388 = math.tanh %387 : vector<8x32xf32>
    %389 = arith.mulf %384, %388 : vector<8x32xf32>
    %390 = arith.truncf %389 : vector<8x32xf32> to vector<8x32xbf16>
    %cst_111 = arith.constant dense<0.000000e+00> : vector<8x128xf32>
    %391 = tpu.matmul %390, %0, %cst_111 {dimension_numbers = #tpu.dot_dimension_numbers<[1], [0], [0], [1], [0, 0, 1, 1], [], []>} : vector<8x32xbf16>, vector<32x128xbf16>, vector<8x128xf32> -> vector<8x128xf32>
    %392 = vector.broadcast %1 : vector<1x128xf32> to vector<8x128xf32>
    %393 = arith.addf %391, %392 : vector<8x128xf32>
    %c48_112 = arith.constant 48 : index
    %c0_113 = arith.constant 0 : index
    %394 = vector.load %arg9[%c48_112, %c0_113] : memref<64x128xf32, #tpu.memory_space<vmem>>, vector<8x128xf32>
    tpu.vector_store %arg9[%c48_112, %c0_113], %393 {strides = array<i32>} : memref<64x128xf32, #tpu.memory_space<vmem>>, vector<8x128xf32>,
    %395 = vector.extract_strided_slice %203 {offsets = [56, 0], sizes = [8, 128], strides = [1, 1]} : vector<64x128xf32> to vector<8x128xf32>
    %396 = arith.truncf %389 : vector<8x32xf32> to vector<8x32xbf16>
    %cst_114 = arith.constant dense<0.000000e+00> : vector<8x128xf32>
    %397 = tpu.matmul %396, %198, %cst_114 {dimension_numbers = #tpu.dot_dimension_numbers<[1], [0], [0], [1], [0, 0, 1, 1], [], []>} : vector<8x32xbf16>, vector<32x128xbf16>, vector<8x128xf32> -> vector<8x128xf32>
    %398 = arith.addf %395, %397 : vector<8x128xf32>
    %399 = arith.negf %398 : vector<8x128xf32>
    %400 = math.exp %399 : vector<8x128xf32>
    %cst_115 = arith.constant 1.000000e+00 : f32
    %401 = vector.broadcast %cst_115 : f32 to vector<8x128xf32>
    %402 = arith.addf %401, %400 : vector<8x128xf32>
    %403 = arith.divf %401, %402 : vector<8x128xf32>
    %404 = vector.extract_strided_slice %403 {offsets = [0, 0], sizes = [8, 32], strides = [1, 1]} : vector<8x128xf32> to vector<8x32xf32>
    %405 = vector.extract_strided_slice %403 {offsets = [0, 32], sizes = [8, 32], strides = [1, 1]} : vector<8x128xf32> to vector<8x32xf32>
    %406 = vector.extract_strided_slice %403 {offsets = [0, 64], sizes = [8, 32], strides = [1, 1]} : vector<8x128xf32> to vector<8x32xf32>
    %cst_116 = arith.constant 2.000000e+00 : f32
    %407 = vector.broadcast %cst_116 : f32 to vector<8x32xf32>
    %408 = arith.mulf %407, %406 : vector<8x32xf32>
    %cst_117 = arith.constant 1.000000e+00 : f32
    %409 = vector.broadcast %cst_117 : f32 to vector<8x32xf32>
    %410 = arith.subf %408, %409 : vector<8x32xf32>
    %411 = vector.extract_strided_slice %403 {offsets = [0, 96], sizes = [8, 32], strides = [1, 1]} : vector<8x128xf32> to vector<8x32xf32>
    %412 = arith.mulf %405, %387 : vector<8x32xf32>
    %413 = arith.mulf %404, %410 : vector<8x32xf32>
    %414 = arith.addf %412, %413 : vector<8x32xf32>
    %415 = math.tanh %414 : vector<8x32xf32>
    %416 = arith.mulf %411, %415 : vector<8x32xf32>
    %417 = arith.truncf %416 : vector<8x32xf32> to vector<8x32xbf16>
    %cst_118 = arith.constant dense<0.000000e+00> : vector<8x128xf32>
    %418 = tpu.matmul %417, %0, %cst_118 {dimension_numbers = #tpu.dot_dimension_numbers<[1], [0], [0], [1], [0, 0, 1, 1], [], []>} : vector<8x32xbf16>, vector<32x128xbf16>, vector<8x128xf32> -> vector<8x128xf32>
    %419 = vector.broadcast %1 : vector<1x128xf32> to vector<8x128xf32>
    %420 = arith.addf %418, %419 : vector<8x128xf32>
    %c56_119 = arith.constant 56 : index
    %c0_120 = arith.constant 0 : index
    %421 = vector.load %arg9[%c56_119, %c0_120] : memref<64x128xf32, #tpu.memory_space<vmem>>, vector<8x128xf32>
    tpu.vector_store %arg9[%c56_119, %c0_120], %420 {strides = array<i32>} : memref<64x128xf32, #tpu.memory_space<vmem>>, vector<8x128xf32>,
    return
  }
}

</mosaic_0001>

<llo_original>
// kernel: lstm_model_forward.1
$region0: #{lstm_model_forward.1}
  #allocation0 [shape = 'u32[]', space=smem, size = 0x4, offset = 0x4, fixed_abs, tag = 'smem constant byte address 0x4 - core index']
  #allocation1 [shape = 'u32[72,128]{1,0:T(1,128)}', space=vmem, size = 0x9000, scoped, tag = 'internal scratch']
  #allocation2 [shape = 'f32[64,32]{1,0:T(8,128)}', space=vmem, size = 0x8000, scoped, tag = 'scratch operand']
  %s0 = inlined_call_operand.vmem [shape: f32[64,16], index: 0, kind: input, shape index: {}]
  %s1 = inlined_call_operand.vmem [shape: bf16[16,128], index: 1, kind: input, shape index: {}]
  %s2 = inlined_call_operand.vmem [shape: bf16[32,128], index: 2, kind: input, shape index: {}]
  %s3 = inlined_call_operand.vmem [shape: f32[1,128], index: 3, kind: input, shape index: {}]
  %s4 = inlined_call_operand.vmem [shape: bf16[32,128], index: 4, kind: input, shape index: {}]
  %s5 = inlined_call_operand.vmem [shape: bf16[32,128], index: 5, kind: input, shape index: {}]
  %s6 = inlined_call_operand.vmem [shape: f32[1,128], index: 6, kind: input, shape index: {}]
  %s7 = inlined_call_operand.vmem [shape: bf16[32,128], index: 7, kind: input, shape index: {}]
  %s8 = inlined_call_operand.vmem [shape: f32[1,128], index: 8, kind: input, shape index: {}]
  %s9 = inlined_call_operand.vmem [shape: f32[64,128], index: 9, kind: output, shape index: {}]
  %s10 = sld [smem:[#allocation0]]
  $region46: #{lstm_model_forward.1} parent=0
    _
  %s12 = ssub.s32 1, %s10
  %s13 = scalar_select 0, %s12, %s10
  // Predicated region
  $region2: #{lstm_model_forward.1} parent=0 // pred_check
    _
  $region3: #{lstm_model_forward.1} parent=0 // pred_check_branch
    %15 = sbr.rel (0) target = $region5
  $region4: #{lstm_model_forward.1} parent=0 // pred_region
    _
  $region5: #{lstm_model_forward.1} parent=0 // pred_fallthru
    _
  // Predicated region
  $region6: #{lstm_model_forward.1} parent=0 // pred_check
    _
  $region7: #{lstm_model_forward.1} parent=0 // pred_check_branch
    %17 = sbr.rel (0) target = $region9
  $region8: #{lstm_model_forward.1} parent=0 // pred_region
    _
  $region9: #{lstm_model_forward.1} parent=0 // pred_fallthru
    _
  // Predicated region
  $region10: #{lstm_model_forward.1} parent=0 // pred_check
    _
  $region11: #{lstm_model_forward.1} parent=0 // pred_check_branch
    %19 = sbr.rel (0) target = $region13
  $region12: #{lstm_model_forward.1} parent=0 // pred_region
    _
  $region13: #{lstm_model_forward.1} parent=0 // pred_fallthru
    _
  // Predicated region
  $region14: #{lstm_model_forward.1} parent=0 // pred_check
    _
  $region15: #{lstm_model_forward.1} parent=0 // pred_check_branch
    %21 = sbr.rel (0) target = $region17
  $region16: #{lstm_model_forward.1} parent=0 // pred_region
    _
  $region17: #{lstm_model_forward.1} parent=0 // pred_fallthru
    _
  // Predicated region
  $region18: #{lstm_model_forward.1} parent=0 // pred_check
    _
  $region19: #{lstm_model_forward.1} parent=0 // pred_check_branch
    %23 = sbr.rel (0) target = $region21
  $region20: #{lstm_model_forward.1} parent=0 // pred_region
    _
  $region21: #{lstm_model_forward.1} parent=0 // pred_fallthru
    _
  // Predicated region
  $region22: #{lstm_model_forward.1} parent=0 // pred_check
    _
  $region23: #{lstm_model_forward.1} parent=0 // pred_check_branch
    %25 = sbr.rel (0) target = $region25
  $region24: #{lstm_model_forward.1} parent=0 // pred_region
    _
  $region25: #{lstm_model_forward.1} parent=0 // pred_fallthru
    _
  // Predicated region
  $region26: #{lstm_model_forward.1} parent=0 // pred_check
    _
  $region27: #{lstm_model_forward.1} parent=0 // pred_check_branch
    %27 = sbr.rel (0) target = $region29
  $region28: #{lstm_model_forward.1} parent=0 // pred_region
    _
  $region29: #{lstm_model_forward.1} parent=0 // pred_fallthru
    _
  // Predicated region
  $region30: #{lstm_model_forward.1} parent=0 // pred_check
    _
  $region31: #{lstm_model_forward.1} parent=0 // pred_check_branch
    %29 = sbr.rel (0) target = $region33
  $region32: #{lstm_model_forward.1} parent=0 // pred_region
    _
  $region33: #{lstm_model_forward.1} parent=0 // pred_fallthru
    _
  // Predicated region
  $region34: #{lstm_model_forward.1} parent=0 // pred_check
    _
  $region35: #{lstm_model_forward.1} parent=0 // pred_check_branch
    %31 = sbr.rel (0) target = $region37
  $region36: #{lstm_model_forward.1} parent=0 // pred_region
    _
  $region37: #{lstm_model_forward.1} parent=0 // pred_fallthru
    _
  %v33 = vld [vmem:[%s7] sm:$0xf]
  %v34 = vld [vmem:[%s7 + $0x4] sm:$0xf]
  %v35 = vld [vmem:[%s7 + $0x8] sm:$0xf]
  %v36 = vld [vmem:[%s7 + $0xc] sm:$0xf]
  %v37 = vld [vmem:[%s8] sm:$0x1]
  %v38 = vld [vmem:[%s0] sm:$0xff]
  %v39 = vld [vmem:[%s0 + $0x8] sm:$0xff]
  %v40 = vld [vmem:[%s0 + $0x10] sm:$0xff]
  %v41 = vld [vmem:[%s0 + $0x18] sm:$0xff]
  %v42 = vld [vmem:[%s0 + $0x20] sm:$0xff]
  %v43 = vld [vmem:[%s0 + $0x28] sm:$0xff]
  %v44 = vld [vmem:[%s0 + $0x30] sm:$0xff]
  %v45 = vld [vmem:[%s0 + $0x38] sm:$0xff]
  %v46 = vld [vmem:[%s1] sm:$0xf]
  %v47 = vld [vmem:[%s1 + $0x4] sm:$0xf]
  %v48 = vld [vmem:[%s2] sm:$0xf]
  %v49 = vld [vmem:[%s2 + $0x4] sm:$0xf]
  %v50 = vld [vmem:[%s2 + $0x8] sm:$0xf]
  %v51 = vld [vmem:[%s2 + $0xc] sm:$0xf]
  %v52 = vld [vmem:[%s3] sm:$0x1]
  %v53 = vpack.c.bf16 %v39, %v38
  %v54 = vpack.c.bf16 %v41, %v40
  %v55 = vpack.c.bf16 %v43, %v42
  %v56 = vpack.c.bf16 %v45, %v44
  %v58 = vperm.slane %v52, 0
  %v62 = vunpack.c.l.b16 %v46
  %v63 = vunpack.c.l.b16 %v47
  %v64 = vpack.c.b16 %v63, %v62
  %vm66 = vcmask 130048
  %v68 = vsel %vm66, %v53, 0
  %v71 = vsel %vm66, %v54, 0
  %v74 = vsel %vm66, %v55, 0
  %v77 = vsel %vm66, %v56, 0
  %79 = vmatpush.bf16.msra.mxu0 0
  %80 = vmatpush.bf16.msra.mxu0 0
  %81 = vmatpush.bf16.msra.mxu0 0
  %82 = vmatpush.bf16.msra.mxu0 0
  %83 = vmatpush.bf16.msra.mxu0 0
  %84 = vmatpush.bf16.msra.mxu0 0
  %85 = vmatpush.bf16.msra.mxu0 0
  %86 = vmatpush.bf16.msra.mxu0 %v64
  %87 = vmatmul.bf16.gmra.mxu0 %v68
  %v88 = vpop.f32.mrf.mxu0
  %v89 = vadd.f32 %v58, %v88
  %v90 = vpop.f32.mrf.mxu0
  %v91 = vadd.f32 %v58, %v90
  %92 = vmatmul.bf16.gmra.mxu0 %v71
  %v93 = vpop.f32.mrf.mxu0
  %v94 = vadd.f32 %v58, %v93
  %v95 = vpop.f32.mrf.mxu0
  %v96 = vadd.f32 %v58, %v95
  %97 = vmatmul.bf16.gmra.mxu0 %v74
  %v98 = vpop.f32.mrf.mxu0
  %v99 = vadd.f32 %v58, %v98
  %v100 = vpop.f32.mrf.mxu0
  %v101 = vadd.f32 %v58, %v100
  %102 = vmatmul.bf16.gmra.mxu0 %v77
  %v103 = vpop.f32.mrf.mxu0
  %v104 = vadd.f32 %v58, %v103
  %v105 = vpop.f32.mrf.mxu0
  %v106 = vadd.f32 %v58, %v105
  %107 = vdwg.mxu0
  %v112 = vunpack.c.l.b16 %v48
  %v113 = vunpack.c.l.b16 %v49
  %v114 = vunpack.c.l.b16 %v50
  %v115 = vunpack.c.l.b16 %v51
  %v116 = vpack.c.b16 %v113, %v112
  %v117 = vpack.c.b16 %v115, %v114
  %vm120 = vcmask 261120
  %v122 = vsel %vm120, 0, 0
  %124 = vmatpush.bf16.msra.mxu0 0
  %125 = vmatpush.bf16.msra.mxu0 0
  %126 = vmatpush.bf16.msra.mxu0 0
  %127 = vmatpush.bf16.msra.mxu0 0
  %128 = vmatpush.bf16.msra.mxu0 0
  %129 = vmatpush.bf16.msra.mxu0 0
  %130 = vmatpush.bf16.msra.mxu0 %v117
  %131 = vmatpush.bf16.msra.mxu0 %v116
  %132 = vmatmul.bf16.gmra.mxu0 %v122
  %v133 = vpop.f32.mrf.mxu0
  %v134 = vadd.f32 0.0, %v133
  %v135 = vpop.f32.mrf.mxu0
  %136 = vdwg.mxu0
  %v137 = vadd.f32 %v89, %v134
  %v138 = vxor.u32 %v137, 2147483648
  %v139 = vmul.f32 %v138, 1.442695
  %v140 = vpow.pop %v139
  %v141 = vadd.f32 %v140, 1.0
  %v142 = vrcp.pop %v141
  %v143 = vmul.f32 %v141, %v142
  %v144 = vsub.f32 1.0, %v143
  %v145 = vmul.f32 %v142, %v144
  %v146 = vadd.f32 %v142, %v145
  %vm147 = vweird.f32 %v141
  %vm148 = vweird.f32 %v142
  %vm149 = vmor %vm147, %vm148
  %v150 = vsel %vm149, %v142, %v146
  %v151 = vand.u32 2147483647, %v141
  %vm152 = vcmp.eq.f32.partialorder %v151, 8.507059e+37
  %v153 = vand.u32 %v141, 2147483648
  %v154 = vor.u32 1.1754944e-38, %v153
  %v155 = vsel %vm152, %v154, %v150
  %v156 = vmul.f32 1.0, %v155
  %v157 = vmul.f32 %v156, 2.0
  %v158 = vsub.f32 %v157, 1.0
  %v159 = vmul.f32 %v156, 0.0
  %161 = vrot.lane.b32.xlu0 %v158, 64
  %v162 = vpop.permute.xlu0 %161
  %v164 = vmul.f32 %v156, %v162
  %166 = vrot.lane.b32.xlu0 %v164, 32
  %v167 = vpop.permute.xlu0 %166
  %v169 = vadd.f32 %v159, %v167
  %v170 = vtanh.pop %v169
  %172 = vrot.lane.b32.xlu0 %v170, 64
  %v173 = vpop.permute.xlu0 %172
  %v175 = vmul.f32 %v156, %v173
  %177 = vrot.lane.b32.xlu0 %v175, 32
  %v178 = vpop.permute.xlu0 %177
  %180 = vst.msk [vmem:[#allocation2] sm:$0xff] %vm120, %v178
  %v181 = vpack.c.bf16 %v175, %v175
  %183 = vrot.lane.b32.xlu0 %v181, 32
  %v184 = vpop.permute.xlu0 %183
  %v186 = vsel %vm120, %v184, 0
  %188 = vmatpush.bf16.msra.mxu0 0
  %189 = vmatpush.bf16.msra.mxu0 0
  %190 = vmatpush.bf16.msra.mxu0 0
  %191 = vmatpush.bf16.msra.mxu0 0
  %192 = vmatpush.bf16.msra.mxu0 0
  %193 = vmatpush.bf16.msra.mxu0 0
  %194 = vmatpush.bf16.msra.mxu0 %v117
  %195 = vmatpush.bf16.msra.mxu0 %v116
  %196 = vmatmul.bf16.gmra.mxu0 %v186
  %v197 = vpop.f32.mrf.mxu0
  %v198 = vadd.f32 0.0, %v197
  %v199 = vpop.f32.mrf.mxu0
  %200 = vdwg.mxu0
  %v201 = vadd.f32 %v91, %v198
  %v202 = vxor.u32 %v201, 2147483648
  %v203 = vmul.f32 %v202, 1.442695
  %v204 = vpow.pop %v203
  %v205 = vadd.f32 %v204, 1.0
  %v206 = vrcp.pop %v205
  %v207 = vmul.f32 %v205, %v206
  %v208 = vsub.f32 1.0, %v207
  %v209 = vmul.f32 %v206, %v208
  %v210 = vadd.f32 %v206, %v209
  %vm211 = vweird.f32 %v205
  %vm212 = vweird.f32 %v206
  %vm213 = vmor %vm211, %vm212
  %v214 = vsel %vm213, %v206, %v210
  %v215 = vand.u32 2147483647, %v205
  %vm216 = vcmp.eq.f32.partialorder %v215, 8.507059e+37
  %v217 = vand.u32 %v205, 2147483648
  %v218 = vor.u32 1.1754944e-38, %v217
  %v219 = vsel %vm216, %v218, %v214
  %v220 = vmul.f32 1.0, %v219
  %v221 = vmul.f32 %v220, 2.0
  %v222 = vsub.f32 %v221, 1.0
  %v223 = vmul.f32 %v220, %v169
  %225 = vrot.lane.b32.xlu0 %v222, 64
  %v226 = vpop.permute.xlu0 %225
  %v228 = vmul.f32 %v220, %v226
  %230 = vrot.lane.b32.xlu0 %v228, 32
  %v231 = vpop.permute.xlu0 %230
  %v233 = vadd.f32 %v223, %v231
  %v234 = vtanh.pop %v233
  %236 = vrot.lane.b32.xlu0 %v234, 64
  %v237 = vpop.permute.xlu0 %236
  %v239 = vmul.f32 %v220, %v237
  %241 = vrot.lane.b32.xlu0 %v239, 32
  %v242 = vpop.permute.xlu0 %241
  %244 = vst.msk [vmem:[#allocation2 + $0x8] sm:$0xff] %vm120, %v242
  %v245 = vpack.c.bf16 %v239, %v239
  %247 = vrot.lane.b32.xlu0 %v245, 32
  %v248 = vpop.permute.xlu0 %247
  %v250 = vsel %vm120, %v248, 0
  %252 = vmatpush.bf16.msra.mxu0 0
  %253 = vmatpush.bf16.msra.mxu0 0
  %254 = vmatpush.bf16.msra.mxu0 0
  %255 = vmatpush.bf16.msra.mxu0 0
  %256 = vmatpush.bf16.msra.mxu0 0
  %257 = vmatpush.bf16.msra.mxu0 0
  %258 = vmatpush.bf16.msra.mxu0 %v117
  %259 = vmatpush.bf16.msra.mxu0 %v116
  %260 = vmatmul.bf16.gmra.mxu0 %v250
  %v261 = vpop.f32.mrf.mxu0
  %v262 = vadd.f32 0.0, %v261
  %v263 = vpop.f32.mrf.mxu0
  %264 = vdwg.mxu0
  %v265 = vadd.f32 %v94, %v262
  %v266 = vxor.u32 %v265, 2147483648
  %v267 = vmul.f32 %v266, 1.442695
  %v268 = vpow.pop %v267
  %v269 = vadd.f32 %v268, 1.0
  %v270 = vrcp.pop %v269
  %v271 = vmul.f32 %v269, %v270
  %v272 = vsub.f32 1.0, %v271
  %v273 = vmul.f32 %v270, %v272
  %v274 = vadd.f32 %v270, %v273
  %vm275 = vweird.f32 %v269
  %vm276 = vweird.f32 %v270
  %vm277 = vmor %vm275, %vm276
  %v278 = vsel %vm277, %v270, %v274
  %v279 = vand.u32 2147483647, %v269
  %vm280 = vcmp.eq.f32.partialorder %v279, 8.507059e+37
  %v281 = vand.u32 %v269, 2147483648
  %v282 = vor.u32 1.1754944e-38, %v281
  %v283 = vsel %vm280, %v282, %v278
  %v284 = vmul.f32 1.0, %v283
  %v285 = vmul.f32 %v284, 2.0
  %v286 = vsub.f32 %v285, 1.0
  %v287 = vmul.f32 %v284, %v233
  %289 = vrot.lane.b32.xlu0 %v286, 64
  %v290 = vpop.permute.xlu0 %289
  %v292 = vmul.f32 %v284, %v290
  %294 = vrot.lane.b32.xlu0 %v292, 32
  %v295 = vpop.permute.xlu0 %294
  %v297 = vadd.f32 %v287, %v295
  %v298 = vtanh.pop %v297
  %300 = vrot.lane.b32.xlu0 %v298, 64
  %v301 = vpop.permute.xlu0 %300
  %v303 = vmul.f32 %v284, %v301
  %305 = vrot.lane.b32.xlu0 %v303, 32
  %v306 = vpop.permute.xlu0 %305
  %308 = vst.msk [vmem:[#allocation2 + $0x10] sm:$0xff] %vm120, %v306
  %v309 = vpack.c.bf16 %v303, %v303
  %311 = vrot.lane.b32.xlu0 %v309, 32
  %v312 = vpop.permute.xlu0 %311
  %v314 = vsel %vm120, %v312, 0
  %316 = vmatpush.bf16.msra.mxu0 0
  %317 = vmatpush.bf16.msra.mxu0 0
  %318 = vmatpush.bf16.msra.mxu0 0
  %319 = vmatpush.bf16.msra.mxu0 0
  %320 = vmatpush.bf16.msra.mxu0 0
  %321 = vmatpush.bf16.msra.mxu0 0
  %322 = vmatpush.bf16.msra.mxu0 %v117
  %323 = vmatpush.bf16.msra.mxu0 %v116
  %324 = vmatmul.bf16.gmra.mxu0 %v314
  %v325 = vpop.f32.mrf.mxu0
  %v326 = vadd.f32 0.0, %v325
  %v327 = vpop.f32.mrf.mxu0
  %328 = vdwg.mxu0
  %v329 = vadd.f32 %v96, %v326
  %v330 = vxor.u32 %v329, 2147483648
  %v331 = vmul.f32 %v330, 1.442695
  %v332 = vpow.pop %v331
  %v333 = vadd.f32 %v332, 1.0
  %v334 = vrcp.pop %v333
  %v335 = vmul.f32 %v333, %v334
  %v336 = vsub.f32 1.0, %v335
  %v337 = vmul.f32 %v334, %v336
  %v338 = vadd.f32 %v334, %v337
  %vm339 = vweird.f32 %v333
  %vm340 = vweird.f32 %v334
  %vm341 = vmor %vm339, %vm340
  %v342 = vsel %vm341, %v334, %v338
  %v343 = vand.u32 2147483647, %v333
  %vm344 = vcmp.eq.f32.partialorder %v343, 8.507059e+37
  %v345 = vand.u32 %v333, 2147483648
  %v346 = vor.u32 1.1754944e-38, %v345
  %v347 = vsel %vm344, %v346, %v342
  %v348 = vmul.f32 1.0, %v347
  %v349 = vmul.f32 %v348, 2.0
  %v350 = vsub.f32 %v349, 1.0
  %v351 = vmul.f32 %v348, %v297
  %353 = vrot.lane.b32.xlu0 %v350, 64
  %v354 = vpop.permute.xlu0 %353
  %v356 = vmul.f32 %v348, %v354
  %358 = vrot.lane.b32.xlu0 %v356, 32
  %v359 = vpop.permute.xlu0 %358
  %v361 = vadd.f32 %v351, %v359
  %v362 = vtanh.pop %v361
  %364 = vrot.lane.b32.xlu0 %v362, 64
  %v365 = vpop.permute.xlu0 %364
  %v367 = vmul.f32 %v348, %v365
  %369 = vrot.lane.b32.xlu0 %v367, 32
  %v370 = vpop.permute.xlu0 %369
  %372 = vst.msk [vmem:[#allocation2 + $0x18] sm:$0xff] %vm120, %v370
  %v373 = vpack.c.bf16 %v367, %v367
  %375 = vrot.lane.b32.xlu0 %v373, 32
  %v376 = vpop.permute.xlu0 %375
  %v378 = vsel %vm120, %v376, 0
  %380 = vmatpush.bf16.msra.mxu0 0
  %381 = vmatpush.bf16.msra.mxu0 0
  %382 = vmatpush.bf16.msra.mxu0 0
  %383 = vmatpush.bf16.msra.mxu0 0
  %384 = vmatpush.bf16.msra.mxu0 0
  %385 = vmatpush.bf16.msra.mxu0 0
  %386 = vmatpush.bf16.msra.mxu0 %v117
  %387 = vmatpush.bf16.msra.mxu0 %v116
  %388 = vmatmul.bf16.gmra.mxu0 %v378
  %v389 = vpop.f32.mrf.mxu0
  %v390 = vadd.f32 0.0, %v389
  %v391 = vpop.f32.mrf.mxu0
  %392 = vdwg.mxu0
  %v393 = vadd.f32 %v99, %v390
  %v394 = vxor.u32 %v393, 2147483648
  %v395 = vmul.f32 %v394, 1.442695
  %v396 = vpow.pop %v395
  %v397 = vadd.f32 %v396, 1.0
  %v398 = vrcp.pop %v397
  %v399 = vmul.f32 %v397, %v398
  %v400 = vsub.f32 1.0, %v399
  %v401 = vmul.f32 %v398, %v400
  %v402 = vadd.f32 %v398, %v401
  %vm403 = vweird.f32 %v397
  %vm404 = vweird.f32 %v398
  %vm405 = vmor %vm403, %vm404
  %v406 = vsel %vm405, %v398, %v402
  %v407 = vand.u32 2147483647, %v397
  %vm408 = vcmp.eq.f32.partialorder %v407, 8.507059e+37
  %v409 = vand.u32 %v397, 2147483648
  %v410 = vor.u32 1.1754944e-38, %v409
  %v411 = vsel %vm408, %v410, %v406
  %v412 = vmul.f32 1.0, %v411
  %v413 = vmul.f32 %v412, 2.0
  %v414 = vsub.f32 %v413, 1.0
  %v415 = vmul.f32 %v412, %v361
  %417 = vrot.lane.b32.xlu0 %v414, 64
  %v418 = vpop.permute.xlu0 %417
  %v420 = vmul.f32 %v412, %v418
  %422 = vrot.lane.b32.xlu0 %v420, 32
  %v423 = vpop.permute.xlu0 %422
  %v425 = vadd.f32 %v415, %v423
  %v426 = vtanh.pop %v425
  %428 = vrot.lane.b32.xlu0 %v426, 64
  %v429 = vpop.permute.xlu0 %428
  %v431 = vmul.f32 %v412, %v429
  %433 = vrot.lane.b32.xlu0 %v431, 32
  %v434 = vpop.permute.xlu0 %433
  %436 = vst.msk [vmem:[#allocation2 + $0x20] sm:$0xff] %vm120, %v434
  %v437 = vpack.c.bf16 %v431, %v431
  %439 = vrot.lane.b32.xlu0 %v437, 32
  %v440 = vpop.permute.xlu0 %439
  %v442 = vsel %vm120, %v440, 0
  %444 = vmatpush.bf16.msra.mxu0 0
  %445 = vmatpush.bf16.msra.mxu0 0
  %446 = vmatpush.bf16.msra.mxu0 0
  %447 = vmatpush.bf16.msra.mxu0 0
  %448 = vmatpush.bf16.msra.mxu0 0
  %449 = vmatpush.bf16.msra.mxu0 0
  %450 = vmatpush.bf16.msra.mxu0 %v117
  %451 = vmatpush.bf16.msra.mxu0 %v116
  %452 = vmatmul.bf16.gmra.mxu0 %v442
  %v453 = vpop.f32.mrf.mxu0
  %v454 = vadd.f32 0.0, %v453
  %v455 = vpop.f32.mrf.mxu0
  %456 = vdwg.mxu0
  %v457 = vadd.f32 %v101, %v454
  %v458 = vxor.u32 %v457, 2147483648
  %v459 = vmul.f32 %v458, 1.442695
  %v460 = vpow.pop %v459
  %v461 = vadd.f32 %v460, 1.0
  %v462 = vrcp.pop %v461
  %v463 = vmul.f32 %v461, %v462
  %v464 = vsub.f32 1.0, %v463
  %v465 = vmul.f32 %v462, %v464
  %v466 = vadd.f32 %v462, %v465
  %vm467 = vweird.f32 %v461
  %vm468 = vweird.f32 %v462
  %vm469 = vmor %vm467, %vm468
  %v470 = vsel %vm469, %v462, %v466
  %v471 = vand.u32 2147483647, %v461
  %vm472 = vcmp.eq.f32.partialorder %v471, 8.507059e+37
  %v473 = vand.u32 %v461, 2147483648
  %v474 = vor.u32 1.1754944e-38, %v473
  %v475 = vsel %vm472, %v474, %v470
  %v476 = vmul.f32 1.0, %v475
  %v477 = vmul.f32 %v476, 2.0
  %v478 = vsub.f32 %v477, 1.0
  %v479 = vmul.f32 %v476, %v425
  %481 = vrot.lane.b32.xlu0 %v478, 64
  %v482 = vpop.permute.xlu0 %481
  %v484 = vmul.f32 %v476, %v482
  %486 = vrot.lane.b32.xlu0 %v484, 32
  %v487 = vpop.permute.xlu0 %486
  %v489 = vadd.f32 %v479, %v487
  %v490 = vtanh.pop %v489
  %492 = vrot.lane.b32.xlu0 %v490, 64
  %v493 = vpop.permute.xlu0 %492
  %v495 = vmul.f32 %v476, %v493
  %497 = vrot.lane.b32.xlu0 %v495, 32
  %v498 = vpop.permute.xlu0 %497
  %500 = vst.msk [vmem:[#allocation2 + $0x28] sm:$0xff] %vm120, %v498
  %v501 = vpack.c.bf16 %v495, %v495
  %503 = vrot.lane.b32.xlu0 %v501, 32
  %v504 = vpop.permute.xlu0 %503
  %v506 = vsel %vm120, %v504, 0
  %508 = vmatpush.bf16.msra.mxu0 0
  %509 = vmatpush.bf16.msra.mxu0 0
  %510 = vmatpush.bf16.msra.mxu0 0
  %511 = vmatpush.bf16.msra.mxu0 0
  %512 = vmatpush.bf16.msra.mxu0 0
  %513 = vmatpush.bf16.msra.mxu0 0
  %514 = vmatpush.bf16.msra.mxu0 %v117
  %515 = vmatpush.bf16.msra.mxu0 %v116
  %516 = vmatmul.bf16.gmra.mxu0 %v506
  %v517 = vpop.f32.mrf.mxu0
  %v518 = vadd.f32 0.0, %v517
  %v519 = vpop.f32.mrf.mxu0
  %520 = vdwg.mxu0
  %v521 = vadd.f32 %v104, %v518
  %v522 = vxor.u32 %v521, 2147483648
  %v523 = vmul.f32 %v522, 1.442695
  %v524 = vpow.pop %v523
  %v525 = vadd.f32 %v524, 1.0
  %v526 = vrcp.pop %v525
  %v527 = vmul.f32 %v525, %v526
  %v528 = vsub.f32 1.0, %v527
  %v529 = vmul.f32 %v526, %v528
  %v530 = vadd.f32 %v526, %v529
  %vm531 = vweird.f32 %v525
  %vm532 = vweird.f32 %v526
  %vm533 = vmor %vm531, %vm532
  %v534 = vsel %vm533, %v526, %v530
  %v535 = vand.u32 2147483647, %v525
  %vm536 = vcmp.eq.f32.partialorder %v535, 8.507059e+37
  %v537 = vand.u32 %v525, 2147483648
  %v538 = vor.u32 1.1754944e-38, %v537
  %v539 = vsel %vm536, %v538, %v534
  %v540 = vmul.f32 1.0, %v539
  %v541 = vmul.f32 %v540, 2.0
  %v542 = vsub.f32 %v541, 1.0
  %v543 = vmul.f32 %v540, %v489
  %545 = vrot.lane.b32.xlu0 %v542, 64
  %v546 = vpop.permute.xlu0 %545
  %v548 = vmul.f32 %v540, %v546
  %550 = vrot.lane.b32.xlu0 %v548, 32
  %v551 = vpop.permute.xlu0 %550
  %v553 = vadd.f32 %v543, %v551
  %v554 = vtanh.pop %v553
  %556 = vrot.lane.b32.xlu0 %v554, 64
  %v557 = vpop.permute.xlu0 %556
  %v559 = vmul.f32 %v540, %v557
  %561 = vrot.lane.b32.xlu0 %v559, 32
  %v562 = vpop.permute.xlu0 %561
  %564 = vst.msk [vmem:[#allocation2 + $0x30] sm:$0xff] %vm120, %v562
  %v565 = vpack.c.bf16 %v559, %v559
  %567 = vrot.lane.b32.xlu0 %v565, 32
  %v568 = vpop.permute.xlu0 %567
  %v570 = vsel %vm120, %v568, 0
  %572 = vmatpush.bf16.msra.mxu0 0
  %573 = vmatpush.bf16.msra.mxu0 0
  %574 = vmatpush.bf16.msra.mxu0 0
  %575 = vmatpush.bf16.msra.mxu0 0
  %576 = vmatpush.bf16.msra.mxu0 0
  %577 = vmatpush.bf16.msra.mxu0 0
  %578 = vmatpush.bf16.msra.mxu0 %v117
  %579 = vmatpush.bf16.msra.mxu0 %v116
  %580 = vmatmul.bf16.gmra.mxu0 %v570
  %v581 = vpop.f32.mrf.mxu0
  %v582 = vadd.f32 0.0, %v581
  %v583 = vpop.f32.mrf.mxu0
  %584 = vdwg.mxu0
  %v585 = vadd.f32 %v106, %v582
  %v586 = vxor.u32 %v585, 2147483648
  %v587 = vmul.f32 %v586, 1.442695
  %v588 = vpow.pop %v587
  %v589 = vadd.f32 %v588, 1.0
  %v590 = vrcp.pop %v589
  %v591 = vmul.f32 %v589, %v590
  %v592 = vsub.f32 1.0, %v591
  %v593 = vmul.f32 %v590, %v592
  %v594 = vadd.f32 %v590, %v593
  %vm595 = vweird.f32 %v589
  %vm596 = vweird.f32 %v590
  %vm597 = vmor %vm595, %vm596
  %v598 = vsel %vm597, %v590, %v594
  %v599 = vand.u32 2147483647, %v589
  %vm600 = vcmp.eq.f32.partialorder %v599, 8.507059e+37
  %v601 = vand.u32 %v589, 2147483648
  %v602 = vor.u32 1.1754944e-38, %v601
  %v603 = vsel %vm600, %v602, %v598
  %v604 = vmul.f32 1.0, %v603
  %v605 = vmul.f32 %v604, 2.0
  %v606 = vsub.f32 %v605, 1.0
  %v607 = vmul.f32 %v604, %v553
  %609 = vrot.lane.b32.xlu0 %v606, 64
  %v610 = vpop.permute.xlu0 %609
  %v612 = vmul.f32 %v604, %v610
  %614 = vrot.lane.b32.xlu0 %v612, 32
  %v615 = vpop.permute.xlu0 %614
  %v617 = vadd.f32 %v607, %v615
  %v618 = vtanh.pop %v617
  %620 = vrot.lane.b32.xlu0 %v618, 64
  %v621 = vpop.permute.xlu0 %620
  %v623 = vmul.f32 %v604, %v621
  %625 = vrot.lane.b32.xlu0 %v623, 32
  %v626 = vpop.permute.xlu0 %625
  %628 = vst.msk [vmem:[#allocation2 + $0x38] sm:$0xff] %vm120, %v626
  %v629 = vld [vmem:[#allocation2] sm:$0xff]
  %v630 = vld [vmem:[#allocation2 + $0x8] sm:$0xff]
  %v631 = vld [vmem:[#allocation2 + $0x10] sm:$0xff]
  %v632 = vld [vmem:[#allocation2 + $0x18] sm:$0xff]
  %v633 = vld [vmem:[#allocation2 + $0x20] sm:$0xff]
  %v634 = vld [vmem:[#allocation2 + $0x28] sm:$0xff]
  %v635 = vld [vmem:[#allocation2 + $0x30] sm:$0xff]
  %v636 = vld [vmem:[#allocation2 + $0x38] sm:$0xff]
  %v637 = vld [vmem:[%s4] sm:$0xf]
  %v638 = vld [vmem:[%s4 + $0x4] sm:$0xf]
  %v639 = vld [vmem:[%s4 + $0x8] sm:$0xf]
  %v640 = vld [vmem:[%s4 + $0xc] sm:$0xf]
  %v641 = vld [vmem:[%s5] sm:$0xf]
  %v642 = vld [vmem:[%s5 + $0x4] sm:$0xf]
  %v643 = vld [vmem:[%s5 + $0x8] sm:$0xf]
  %v644 = vld [vmem:[%s5 + $0xc] sm:$0xf]
  %v645 = vld [vmem:[%s6] sm:$0x1]
  %v646 = vpack.c.bf16 %v630, %v629
  %v647 = vpack.c.bf16 %v632, %v631
  %v648 = vpack.c.bf16 %v634, %v633
  %v649 = vpack.c.bf16 %v636, %v635
  %v651 = vperm.slane %v645, 0
  %v657 = vunpack.c.l.b16 %v637
  %v658 = vunpack.c.l.b16 %v638
  %v659 = vunpack.c.l.b16 %v639
  %v660 = vunpack.c.l.b16 %v640
  %v661 = vpack.c.b16 %v658, %v657
  %v662 = vpack.c.b16 %v660, %v659
  %v666 = vsel %vm120, %v646, 0
  %v669 = vsel %vm120, %v647, 0
  %v672 = vsel %vm120, %v648, 0
  %v675 = vsel %vm120, %v649, 0
  %677 = vmatpush.bf16.msra.mxu0 0
  %678 = vmatpush.bf16.msra.mxu0 0
  %679 = vmatpush.bf16.msra.mxu0 0
  %680 = vmatpush.bf16.msra.mxu0 0
  %681 = vmatpush.bf16.msra.mxu0 0
  %682 = vmatpush.bf16.msra.mxu0 0
  %683 = vmatpush.bf16.msra.mxu0 %v662
  %684 = vmatpush.bf16.msra.mxu0 %v661
  %685 = vmatmul.bf16.gmra.mxu0 %v666
  %v686 = vpop.f32.mrf.mxu0
  %v687 = vadd.f32 %v651, %v686
  %v688 = vpop.f32.mrf.mxu0
  %v689 = vadd.f32 %v651, %v688
  %690 = vmatmul.bf16.gmra.mxu0 %v669
  %v691 = vpop.f32.mrf.mxu0
  %v692 = vadd.f32 %v651, %v691
  %v693 = vpop.f32.mrf.mxu0
  %v694 = vadd.f32 %v651, %v693
  %695 = vmatmul.bf16.gmra.mxu0 %v672
  %v696 = vpop.f32.mrf.mxu0
  %v697 = vadd.f32 %v651, %v696
  %v698 = vpop.f32.mrf.mxu0
  %v699 = vadd.f32 %v651, %v698
  %700 = vmatmul.bf16.gmra.mxu0 %v675
  %v701 = vpop.f32.mrf.mxu0
  %v702 = vadd.f32 %v651, %v701
  %v703 = vpop.f32.mrf.mxu0
  %v704 = vadd.f32 %v651, %v703
  %705 = vdwg.mxu0
  %v710 = vunpack.c.l.b16 %v641
  %v711 = vunpack.c.l.b16 %v642
  %v712 = vunpack.c.l.b16 %v643
  %v713 = vunpack.c.l.b16 %v644
  %v714 = vpack.c.b16 %v711, %v710
  %v715 = vpack.c.b16 %v713, %v712
  %718 = vmatpush.bf16.msra.mxu0 0
  %719 = vmatpush.bf16.msra.mxu0 0
  %720 = vmatpush.bf16.msra.mxu0 0
  %721 = vmatpush.bf16.msra.mxu0 0
  %722 = vmatpush.bf16.msra.mxu0 0
  %723 = vmatpush.bf16.msra.mxu0 0
  %724 = vmatpush.bf16.msra.mxu0 %v715
  %725 = vmatpush.bf16.msra.mxu0 %v714
  %726 = vmatmul.bf16.gmra.mxu0 %v122
  %v727 = vpop.f32.mrf.mxu0
  %v728 = vadd.f32 0.0, %v727
  %v729 = vpop.f32.mrf.mxu0
  %730 = vdwg.mxu0
  %v731 = vadd.f32 %v687, %v728
  %v732 = vxor.u32 %v731, 2147483648
  %v733 = vmul.f32 %v732, 1.442695
  %v734 = vpow.pop %v733
  %v735 = vadd.f32 %v734, 1.0
  %v736 = vrcp.pop %v735
  %v737 = vmul.f32 %v735, %v736
  %v738 = vsub.f32 1.0, %v737
  %v739 = vmul.f32 %v736, %v738
  %v740 = vadd.f32 %v736, %v739
  %vm741 = vweird.f32 %v735
  %vm742 = vweird.f32 %v736
  %vm743 = vmor %vm741, %vm742
  %v744 = vsel %vm743, %v736, %v740
  %v745 = vand.u32 2147483647, %v735
  %vm746 = vcmp.eq.f32.partialorder %v745, 8.507059e+37
  %v747 = vand.u32 %v735, 2147483648
  %v748 = vor.u32 1.1754944e-38, %v747
  %v749 = vsel %vm746, %v748, %v744
  %v750 = vmul.f32 1.0, %v749
  %v751 = vmul.f32 %v750, 2.0
  %v752 = vsub.f32 %v751, 1.0
  %v753 = vmul.f32 %v750, 0.0
  %755 = vrot.lane.b32.xlu0 %v752, 64
  %v756 = vpop.permute.xlu0 %755
  %v758 = vmul.f32 %v750, %v756
  %760 = vrot.lane.b32.xlu0 %v758, 32
  %v761 = vpop.permute.xlu0 %760
  %v763 = vadd.f32 %v753, %v761
  %v764 = vtanh.pop %v763
  %766 = vrot.lane.b32.xlu0 %v764, 64
  %v767 = vpop.permute.xlu0 %766
  %v769 = vmul.f32 %v750, %v767
  %v770 = vpack.c.bf16 %v769, %v769
  %v772 = vperm.slane %v37, 0
  %775 = vrot.lane.b32.xlu0 %v770, 32
  %v776 = vpop.permute.xlu0 %775
  %v781 = vunpack.c.l.b16 %v33
  %v782 = vunpack.c.l.b16 %v34
  %v783 = vunpack.c.l.b16 %v35
  %v784 = vunpack.c.l.b16 %v36
  %v785 = vpack.c.b16 %v782, %v781
  %v786 = vpack.c.b16 %v784, %v783
  %v790 = vsel %vm120, %v776, 0
  %792 = vmatpush.bf16.msra.mxu0 0
  %793 = vmatpush.bf16.msra.mxu0 0
  %794 = vmatpush.bf16.msra.mxu0 0
  %795 = vmatpush.bf16.msra.mxu0 0
  %796 = vmatpush.bf16.msra.mxu0 0
  %797 = vmatpush.bf16.msra.mxu0 0
  %798 = vmatpush.bf16.msra.mxu0 %v786
  %799 = vmatpush.bf16.msra.mxu0 %v785
  %800 = vmatmul.bf16.gmra.mxu0 %v790
  %v801 = vpop.f32.mrf.mxu0
  %v802 = vadd.f32 %v772, %v801
  %v803 = vpop.f32.mrf.mxu0
  %804 = vdwg.mxu0
  %805 = vst [vmem:[%s9] sm:$0xff] %v802
  %806 = vmatpush.bf16.msra.mxu0 0
  %807 = vmatpush.bf16.msra.mxu0 0
  %808 = vmatpush.bf16.msra.mxu0 0
  %809 = vmatpush.bf16.msra.mxu0 0
  %810 = vmatpush.bf16.msra.mxu0 0
  %811 = vmatpush.bf16.msra.mxu0 0
  %812 = vmatpush.bf16.msra.mxu0 %v715
  %813 = vmatpush.bf16.msra.mxu0 %v714
  %814 = vmatmul.bf16.gmra.mxu0 %v790
  %v815 = vpop.f32.mrf.mxu0
  %v816 = vadd.f32 0.0, %v815
  %v817 = vpop.f32.mrf.mxu0
  %818 = vdwg.mxu0
  %v819 = vadd.f32 %v689, %v816
  %v820 = vxor.u32 %v819, 2147483648
  %v821 = vmul.f32 %v820, 1.442695
  %v822 = vpow.pop %v821
  %v823 = vadd.f32 %v822, 1.0
  %v824 = vrcp.pop %v823
  %v825 = vmul.f32 %v823, %v824
  %v826 = vsub.f32 1.0, %v825
  %v827 = vmul.f32 %v824, %v826
  %v828 = vadd.f32 %v824, %v827
  %vm829 = vweird.f32 %v823
  %vm830 = vweird.f32 %v824
  %vm831 = vmor %vm829, %vm830
  %v832 = vsel %vm831, %v824, %v828
  %v833 = vand.u32 2147483647, %v823
  %vm834 = vcmp.eq.f32.partialorder %v833, 8.507059e+37
  %v835 = vand.u32 %v823, 2147483648
  %v836 = vor.u32 1.1754944e-38, %v835
  %v837 = vsel %vm834, %v836, %v832
  %v838 = vmul.f32 1.0, %v837
  %v839 = vmul.f32 %v838, 2.0
  %v840 = vsub.f32 %v839, 1.0
  %v841 = vmul.f32 %v838, %v763
  %843 = vrot.lane.b32.xlu0 %v840, 64
  %v844 = vpop.permute.xlu0 %843
  %v846 = vmul.f32 %v838, %v844
  %848 = vrot.lane.b32.xlu0 %v846, 32
  %v849 = vpop.permute.xlu0 %848
  %v851 = vadd.f32 %v841, %v849
  %v852 = vtanh.pop %v851
  %854 = vrot.lane.b32.xlu0 %v852, 64
  %v855 = vpop.permute.xlu0 %854
  %v857 = vmul.f32 %v838, %v855
  %v858 = vpack.c.bf16 %v857, %v857
  %860 = vrot.lane.b32.xlu0 %v858, 32
  %v861 = vpop.permute.xlu0 %860
  %v863 = vsel %vm120, %v861, 0
  %865 = vmatpush.bf16.msra.mxu0 0
  %866 = vmatpush.bf16.msra.mxu0 0
  %867 = vmatpush.bf16.msra.mxu0 0
  %868 = vmatpush.bf16.msra.mxu0 0
  %869 = vmatpush.bf16.msra.mxu0 0
  %870 = vmatpush.bf16.msra.mxu0 0
  %871 = vmatpush.bf16.msra.mxu0 %v786
  %872 = vmatpush.bf16.msra.mxu0 %v785
  %873 = vmatmul.bf16.gmra.mxu0 %v863
  %v874 = vpop.f32.mrf.mxu0
  %v875 = vadd.f32 %v772, %v874
  %v876 = vpop.f32.mrf.mxu0
  %877 = vdwg.mxu0
  %878 = vst [vmem:[%s9 + $0x8] sm:$0xff] %v875
  %879 = vmatpush.bf16.msra.mxu0 0
  %880 = vmatpush.bf16.msra.mxu0 0
  %881 = vmatpush.bf16.msra.mxu0 0
  %882 = vmatpush.bf16.msra.mxu0 0
  %883 = vmatpush.bf16.msra.mxu0 0
  %884 = vmatpush.bf16.msra.mxu0 0
  %885 = vmatpush.bf16.msra.mxu0 %v715
  %886 = vmatpush.bf16.msra.mxu0 %v714
  %887 = vmatmul.bf16.gmra.mxu0 %v863
  %v888 = vpop.f32.mrf.mxu0
  %v889 = vadd.f32 0.0, %v888
  %v890 = vpop.f32.mrf.mxu0
  %891 = vdwg.mxu0
  %v892 = vadd.f32 %v692, %v889
  %v893 = vxor.u32 %v892, 2147483648
  %v894 = vmul.f32 %v893, 1.442695
  %v895 = vpow.pop %v894
  %v896 = vadd.f32 %v895, 1.0
  %v897 = vrcp.pop %v896
  %v898 = vmul.f32 %v896, %v897
  %v899 = vsub.f32 1.0, %v898
  %v900 = vmul.f32 %v897, %v899
  %v901 = vadd.f32 %v897, %v900
  %vm902 = vweird.f32 %v896
  %vm903 = vweird.f32 %v897
  %vm904 = vmor %vm902, %vm903
  %v905 = vsel %vm904, %v897, %v901
  %v906 = vand.u32 2147483647, %v896
  %vm907 = vcmp.eq.f32.partialorder %v906, 8.507059e+37
  %v908 = vand.u32 %v896, 2147483648
  %v909 = vor.u32 1.1754944e-38, %v908
  %v910 = vsel %vm907, %v909, %v905
  %v911 = vmul.f32 1.0, %v910
  %v912 = vmul.f32 %v911, 2.0
  %v913 = vsub.f32 %v912, 1.0
  %v914 = vmul.f32 %v911, %v851
  %916 = vrot.lane.b32.xlu0 %v913, 64
  %v917 = vpop.permute.xlu0 %916
  %v919 = vmul.f32 %v911, %v917
  %921 = vrot.lane.b32.xlu0 %v919, 32
  %v922 = vpop.permute.xlu0 %921
  %v924 = vadd.f32 %v914, %v922
  %v925 = vtanh.pop %v924
  %927 = vrot.lane.b32.xlu0 %v925, 64
  %v928 = vpop.permute.xlu0 %927
  %v930 = vmul.f32 %v911, %v928
  %v931 = vpack.c.bf16 %v930, %v930
  %933 = vrot.lane.b32.xlu0 %v931, 32
  %v934 = vpop.permute.xlu0 %933
  %v936 = vsel %vm120, %v934, 0
  %938 = vmatpush.bf16.msra.mxu0 0
  %939 = vmatpush.bf16.msra.mxu0 0
  %940 = vmatpush.bf16.msra.mxu0 0
  %941 = vmatpush.bf16.msra.mxu0 0
  %942 = vmatpush.bf16.msra.mxu0 0
  %943 = vmatpush.bf16.msra.mxu0 0
  %944 = vmatpush.bf16.msra.mxu0 %v786
  %945 = vmatpush.bf16.msra.mxu0 %v785
  %946 = vmatmul.bf16.gmra.mxu0 %v936
  %v947 = vpop.f32.mrf.mxu0
  %v948 = vadd.f32 %v772, %v947
  %v949 = vpop.f32.mrf.mxu0
  %950 = vdwg.mxu0
  %951 = vst [vmem:[%s9 + $0x10] sm:$0xff] %v948
  %952 = vmatpush.bf16.msra.mxu0 0
  %953 = vmatpush.bf16.msra.mxu0 0
  %954 = vmatpush.bf16.msra.mxu0 0
  %955 = vmatpush.bf16.msra.mxu0 0
  %956 = vmatpush.bf16.msra.mxu0 0
  %957 = vmatpush.bf16.msra.mxu0 0
  %958 = vmatpush.bf16.msra.mxu0 %v715
  %959 = vmatpush.bf16.msra.mxu0 %v714
  %960 = vmatmul.bf16.gmra.mxu0 %v936
  %v961 = vpop.f32.mrf.mxu0
  %v962 = vadd.f32 0.0, %v961
  %v963 = vpop.f32.mrf.mxu0
  %964 = vdwg.mxu0
  %v965 = vadd.f32 %v694, %v962
  %v966 = vxor.u32 %v965, 2147483648
  %v967 = vmul.f32 %v966, 1.442695
  %v968 = vpow.pop %v967
  %v969 = vadd.f32 %v968, 1.0
  %v970 = vrcp.pop %v969
  %v971 = vmul.f32 %v969, %v970
  %v972 = vsub.f32 1.0, %v971
  %v973 = vmul.f32 %v970, %v972
  %v974 = vadd.f32 %v970, %v973
  %vm975 = vweird.f32 %v969
  %vm976 = vweird.f32 %v970
  %vm977 = vmor %vm975, %vm976
  %v978 = vsel %vm977, %v970, %v974
  %v979 = vand.u32 2147483647, %v969
  %vm980 = vcmp.eq.f32.partialorder %v979, 8.507059e+37
  %v981 = vand.u32 %v969, 2147483648
  %v982 = vor.u32 1.1754944e-38, %v981
  %v983 = vsel %vm980, %v982, %v978
  %v984 = vmul.f32 1.0, %v983
  %v985 = vmul.f32 %v984, 2.0
  %v986 = vsub.f32 %v985, 1.0
  %v987 = vmul.f32 %v984, %v924
  %989 = vrot.lane.b32.xlu0 %v986, 64
  %v990 = vpop.permute.xlu0 %989
  %v992 = vmul.f32 %v984, %v990
  %994 = vrot.lane.b32.xlu0 %v992, 32
  %v995 = vpop.permute.xlu0 %994
  %v997 = vadd.f32 %v987, %v995
  %v998 = vtanh.pop %v997
  %1000 = vrot.lane.b32.xlu0 %v998, 64
  %v1001 = vpop.permute.xlu0 %1000
  %v1003 = vmul.f32 %v984, %v1001
  %v1004 = vpack.c.bf16 %v1003, %v1003
  %1006 = vrot.lane.b32.xlu0 %v1004, 32
  %v1007 = vpop.permute.xlu0 %1006
  %v1009 = vsel %vm120, %v1007, 0
  %1011 = vmatpush.bf16.msra.mxu0 0
  %1012 = vmatpush.bf16.msra.mxu0 0
  %1013 = vmatpush.bf16.msra.mxu0 0
  %1014 = vmatpush.bf16.msra.mxu0 0
  %1015 = vmatpush.bf16.msra.mxu0 0
  %1016 = vmatpush.bf16.msra.mxu0 0
  %1017 = vmatpush.bf16.msra.mxu0 %v786
  %1018 = vmatpush.bf16.msra.mxu0 %v785
  %1019 = vmatmul.bf16.gmra.mxu0 %v1009
  %v1020 = vpop.f32.mrf.mxu0
  %v1021 = vadd.f32 %v772, %v1020
  %v1022 = vpop.f32.mrf.mxu0
  %1023 = vdwg.mxu0
  %1024 = vst [vmem:[%s9 + $0x18] sm:$0xff] %v1021
  %1025 = vmatpush.bf16.msra.mxu0 0
  %1026 = vmatpush.bf16.msra.mxu0 0
  %1027 = vmatpush.bf16.msra.mxu0 0
  %1028 = vmatpush.bf16.msra.mxu0 0
  %1029 = vmatpush.bf16.msra.mxu0 0
  %1030 = vmatpush.bf16.msra.mxu0 0
  %1031 = vmatpush.bf16.msra.mxu0 %v715
  %1032 = vmatpush.bf16.msra.mxu0 %v714
  %1033 = vmatmul.bf16.gmra.mxu0 %v1009
  %v1034 = vpop.f32.mrf.mxu0
  %v1035 = vadd.f32 0.0, %v1034
  %v1036 = vpop.f32.mrf.mxu0
  %1037 = vdwg.mxu0
  %v1038 = vadd.f32 %v697, %v1035
  %v1039 = vxor.u32 %v1038, 2147483648
  %v1040 = vmul.f32 %v1039, 1.442695
  %v1041 = vpow.pop %v1040
  %v1042 = vadd.f32 %v1041, 1.0
  %v1043 = vrcp.pop %v1042
  %v1044 = vmul.f32 %v1042, %v1043
  %v1045 = vsub.f32 1.0, %v1044
  %v1046 = vmul.f32 %v1043, %v1045
  %v1047 = vadd.f32 %v1043, %v1046
  %vm1048 = vweird.f32 %v1042
  %vm1049 = vweird.f32 %v1043
  %vm1050 = vmor %vm1048, %vm1049
  %v1051 = vsel %vm1050, %v1043, %v1047
  %v1052 = vand.u32 2147483647, %v1042
  %vm1053 = vcmp.eq.f32.partialorder %v1052, 8.507059e+37
  %v1054 = vand.u32 %v1042, 2147483648
  %v1055 = vor.u32 1.1754944e-38, %v1054
  %v1056 = vsel %vm1053, %v1055, %v1051
  %v1057 = vmul.f32 1.0, %v1056
  %v1058 = vmul.f32 %v1057, 2.0
  %v1059 = vsub.f32 %v1058, 1.0
  %v1060 = vmul.f32 %v1057, %v997
  %1062 = vrot.lane.b32.xlu0 %v1059, 64
  %v1063 = vpop.permute.xlu0 %1062
  %v1065 = vmul.f32 %v1057, %v1063
  %1067 = vrot.lane.b32.xlu0 %v1065, 32
  %v1068 = vpop.permute.xlu0 %1067
  %v1070 = vadd.f32 %v1060, %v1068
  %v1071 = vtanh.pop %v1070
  %1073 = vrot.lane.b32.xlu0 %v1071, 64
  %v1074 = vpop.permute.xlu0 %1073
  %v1076 = vmul.f32 %v1057, %v1074
  %v1077 = vpack.c.bf16 %v1076, %v1076
  %1079 = vrot.lane.b32.xlu0 %v1077, 32
  %v1080 = vpop.permute.xlu0 %1079
  %v1082 = vsel %vm120, %v1080, 0
  %1084 = vmatpush.bf16.msra.mxu0 0
  %1085 = vmatpush.bf16.msra.mxu0 0
  %1086 = vmatpush.bf16.msra.mxu0 0
  %1087 = vmatpush.bf16.msra.mxu0 0
  %1088 = vmatpush.bf16.msra.mxu0 0
  %1089 = vmatpush.bf16.msra.mxu0 0
  %1090 = vmatpush.bf16.msra.mxu0 %v786
  %1091 = vmatpush.bf16.msra.mxu0 %v785
  %1092 = vmatmul.bf16.gmra.mxu0 %v1082
  %v1093 = vpop.f32.mrf.mxu0
  %v1094 = vadd.f32 %v772, %v1093
  %v1095 = vpop.f32.mrf.mxu0
  %1096 = vdwg.mxu0
  %1097 = vst [vmem:[%s9 + $0x20] sm:$0xff] %v1094
  %1098 = vmatpush.bf16.msra.mxu0 0
  %1099 = vmatpush.bf16.msra.mxu0 0
  %1100 = vmatpush.bf16.msra.mxu0 0
  %1101 = vmatpush.bf16.msra.mxu0 0
  %1102 = vmatpush.bf16.msra.mxu0 0
  %1103 = vmatpush.bf16.msra.mxu0 0
  %1104 = vmatpush.bf16.msra.mxu0 %v715
  %1105 = vmatpush.bf16.msra.mxu0 %v714
  %1106 = vmatmul.bf16.gmra.mxu0 %v1082
  %v1107 = vpop.f32.mrf.mxu0
  %v1108 = vadd.f32 0.0, %v1107
  %v1109 = vpop.f32.mrf.mxu0
  %1110 = vdwg.mxu0
  %v1111 = vadd.f32 %v699, %v1108
  %v1112 = vxor.u32 %v1111, 2147483648
  %v1113 = vmul.f32 %v1112, 1.442695
  %v1114 = vpow.pop %v1113
  %v1115 = vadd.f32 %v1114, 1.0
  %v1116 = vrcp.pop %v1115
  %v1117 = vmul.f32 %v1115, %v1116
  %v1118 = vsub.f32 1.0, %v1117
  %v1119 = vmul.f32 %v1116, %v1118
  %v1120 = vadd.f32 %v1116, %v1119
  %vm1121 = vweird.f32 %v1115
  %vm1122 = vweird.f32 %v1116
  %vm1123 = vmor %vm1121, %vm1122
  %v1124 = vsel %vm1123, %v1116, %v1120
  %v1125 = vand.u32 2147483647, %v1115
  %vm1126 = vcmp.eq.f32.partialorder %v1125, 8.507059e+37
  %v1127 = vand.u32 %v1115, 2147483648
  %v1128 = vor.u32 1.1754944e-38, %v1127
  %v1129 = vsel %vm1126, %v1128, %v1124
  %v1130 = vmul.f32 1.0, %v1129
  %v1131 = vmul.f32 %v1130, 2.0
  %v1132 = vsub.f32 %v1131, 1.0
  %v1133 = vmul.f32 %v1130, %v1070
  %1135 = vrot.lane.b32.xlu0 %v1132, 64
  %v1136 = vpop.permute.xlu0 %1135
  %v1138 = vmul.f32 %v1130, %v1136
  %1140 = vrot.lane.b32.xlu0 %v1138, 32
  %v1141 = vpop.permute.xlu0 %1140
  %v1143 = vadd.f32 %v1133, %v1141
  %v1144 = vtanh.pop %v1143
  %1146 = vrot.lane.b32.xlu0 %v1144, 64
  %v1147 = vpop.permute.xlu0 %1146
  %v1149 = vmul.f32 %v1130, %v1147
  %v1150 = vpack.c.bf16 %v1149, %v1149
  %1152 = vrot.lane.b32.xlu0 %v1150, 32
  %v1153 = vpop.permute.xlu0 %1152
  %v1155 = vsel %vm120, %v1153, 0
  %1157 = vmatpush.bf16.msra.mxu0 0
  %1158 = vmatpush.bf16.msra.mxu0 0
  %1159 = vmatpush.bf16.msra.mxu0 0
  %1160 = vmatpush.bf16.msra.mxu0 0
  %1161 = vmatpush.bf16.msra.mxu0 0
  %1162 = vmatpush.bf16.msra.mxu0 0
  %1163 = vmatpush.bf16.msra.mxu0 %v786
  %1164 = vmatpush.bf16.msra.mxu0 %v785
  %1165 = vmatmul.bf16.gmra.mxu0 %v1155
  %v1166 = vpop.f32.mrf.mxu0
  %v1167 = vadd.f32 %v772, %v1166
  %v1168 = vpop.f32.mrf.mxu0
  %1169 = vdwg.mxu0
  %1170 = vst [vmem:[%s9 + $0x28] sm:$0xff] %v1167
  %1171 = vmatpush.bf16.msra.mxu0 0
  %1172 = vmatpush.bf16.msra.mxu0 0
  %1173 = vmatpush.bf16.msra.mxu0 0
  %1174 = vmatpush.bf16.msra.mxu0 0
  %1175 = vmatpush.bf16.msra.mxu0 0
  %1176 = vmatpush.bf16.msra.mxu0 0
  %1177 = vmatpush.bf16.msra.mxu0 %v715
  %1178 = vmatpush.bf16.msra.mxu0 %v714
  %1179 = vmatmul.bf16.gmra.mxu0 %v1155
  %v1180 = vpop.f32.mrf.mxu0
  %v1181 = vadd.f32 0.0, %v1180
  %v1182 = vpop.f32.mrf.mxu0
  %1183 = vdwg.mxu0
  %v1184 = vadd.f32 %v702, %v1181
  %v1185 = vxor.u32 %v1184, 2147483648
  %v1186 = vmul.f32 %v1185, 1.442695
  %v1187 = vpow.pop %v1186
  %v1188 = vadd.f32 %v1187, 1.0
  %v1189 = vrcp.pop %v1188
  %v1190 = vmul.f32 %v1188, %v1189
  %v1191 = vsub.f32 1.0, %v1190
  %v1192 = vmul.f32 %v1189, %v1191
  %v1193 = vadd.f32 %v1189, %v1192
  %vm1194 = vweird.f32 %v1188
  %vm1195 = vweird.f32 %v1189
  %vm1196 = vmor %vm1194, %vm1195
  %v1197 = vsel %vm1196, %v1189, %v1193
  %v1198 = vand.u32 2147483647, %v1188
  %vm1199 = vcmp.eq.f32.partialorder %v1198, 8.507059e+37
  %v1200 = vand.u32 %v1188, 2147483648
  %v1201 = vor.u32 1.1754944e-38, %v1200
  %v1202 = vsel %vm1199, %v1201, %v1197
  %v1203 = vmul.f32 1.0, %v1202
  %v1204 = vmul.f32 %v1203, 2.0
  %v1205 = vsub.f32 %v1204, 1.0
  %v1206 = vmul.f32 %v1203, %v1143
  %1208 = vrot.lane.b32.xlu0 %v1205, 64
  %v1209 = vpop.permute.xlu0 %1208
  %v1211 = vmul.f32 %v1203, %v1209
  %1213 = vrot.lane.b32.xlu0 %v1211, 32
  %v1214 = vpop.permute.xlu0 %1213
  %v1216 = vadd.f32 %v1206, %v1214
  %v1217 = vtanh.pop %v1216
  %1219 = vrot.lane.b32.xlu0 %v1217, 64
  %v1220 = vpop.permute.xlu0 %1219
  %v1222 = vmul.f32 %v1203, %v1220
  %v1223 = vpack.c.bf16 %v1222, %v1222
  %1225 = vrot.lane.b32.xlu0 %v1223, 32
  %v1226 = vpop.permute.xlu0 %1225
  %v1228 = vsel %vm120, %v1226, 0
  %1230 = vmatpush.bf16.msra.mxu0 0
  %1231 = vmatpush.bf16.msra.mxu0 0
  %1232 = vmatpush.bf16.msra.mxu0 0
  %1233 = vmatpush.bf16.msra.mxu0 0
  %1234 = vmatpush.bf16.msra.mxu0 0
  %1235 = vmatpush.bf16.msra.mxu0 0
  %1236 = vmatpush.bf16.msra.mxu0 %v786
  %1237 = vmatpush.bf16.msra.mxu0 %v785
  %1238 = vmatmul.bf16.gmra.mxu0 %v1228
  %v1239 = vpop.f32.mrf.mxu0
  %v1240 = vadd.f32 %v772, %v1239
  %v1241 = vpop.f32.mrf.mxu0
  %1242 = vdwg.mxu0
  %1243 = vst [vmem:[%s9 + $0x30] sm:$0xff] %v1240
  %1244 = vmatpush.bf16.msra.mxu0 0
  %1245 = vmatpush.bf16.msra.mxu0 0
  %1246 = vmatpush.bf16.msra.mxu0 0
  %1247 = vmatpush.bf16.msra.mxu0 0
  %1248 = vmatpush.bf16.msra.mxu0 0
  %1249 = vmatpush.bf16.msra.mxu0 0
  %1250 = vmatpush.bf16.msra.mxu0 %v715
  %1251 = vmatpush.bf16.msra.mxu0 %v714
  %1252 = vmatmul.bf16.gmra.mxu0 %v1228
  %v1253 = vpop.f32.mrf.mxu0
  %v1254 = vadd.f32 0.0, %v1253
  %v1255 = vpop.f32.mrf.mxu0
  %1256 = vdwg.mxu0
  %v1257 = vadd.f32 %v704, %v1254
  %v1258 = vxor.u32 %v1257, 2147483648
  %v1259 = vmul.f32 %v1258, 1.442695
  %v1260 = vpow.pop %v1259
  %v1261 = vadd.f32 %v1260, 1.0
  %v1262 = vrcp.pop %v1261
  %v1263 = vmul.f32 %v1261, %v1262
  %v1264 = vsub.f32 1.0, %v1263
  %v1265 = vmul.f32 %v1262, %v1264
  %v1266 = vadd.f32 %v1262, %v1265
  %vm1267 = vweird.f32 %v1261
  %vm1268 = vweird.f32 %v1262
  %vm1269 = vmor %vm1267, %vm1268
  %v1270 = vsel %vm1269, %v1262, %v1266
  %v1271 = vand.u32 2147483647, %v1261
  %vm1272 = vcmp.eq.f32.partialorder %v1271, 8.507059e+37
  %v1273 = vand.u32 %v1261, 2147483648
  %v1274 = vor.u32 1.1754944e-38, %v1273
  %v1275 = vsel %vm1272, %v1274, %v1270
  %v1276 = vmul.f32 1.0, %v1275
  %v1277 = vmul.f32 %v1276, 2.0
  %v1278 = vsub.f32 %v1277, 1.0
  %v1279 = vmul.f32 %v1276, %v1216
  %1281 = vrot.lane.b32.xlu0 %v1278, 64
  %v1282 = vpop.permute.xlu0 %1281
  %v1284 = vmul.f32 %v1276, %v1282
  %1286 = vrot.lane.b32.xlu0 %v1284, 32
  %v1287 = vpop.permute.xlu0 %1286
  %v1289 = vadd.f32 %v1279, %v1287
  %v1290 = vtanh.pop %v1289
  %1292 = vrot.lane.b32.xlu0 %v1290, 64
  %v1293 = vpop.permute.xlu0 %1292
  %v1295 = vmul.f32 %v1276, %v1293
  %v1296 = vpack.c.bf16 %v1295, %v1295
  %1298 = vrot.lane.b32.xlu0 %v1296, 32
  %v1299 = vpop.permute.xlu0 %1298
  %v1301 = vsel %vm120, %v1299, 0
  %1303 = vmatpush.bf16.msra.mxu0 0
  %1304 = vmatpush.bf16.msra.mxu0 0
  %1305 = vmatpush.bf16.msra.mxu0 0
  %1306 = vmatpush.bf16.msra.mxu0 0
  %1307 = vmatpush.bf16.msra.mxu0 0
  %1308 = vmatpush.bf16.msra.mxu0 0
  %1309 = vmatpush.bf16.msra.mxu0 %v786
  %1310 = vmatpush.bf16.msra.mxu0 %v785
  %1311 = vmatmul.bf16.gmra.mxu0 %v1301
  %v1312 = vpop.f32.mrf.mxu0
  %v1313 = vadd.f32 %v772, %v1312
  %v1314 = vpop.f32.mrf.mxu0
  %1315 = vdwg.mxu0
  %1316 = vst [vmem:[%s9 + $0x38] sm:$0xff] %v1313
  // Predicated region
  $region38: #{lstm_model_forward.1} parent=0 // pred_check
    _
  $region39: #{lstm_model_forward.1} parent=0 // pred_check_branch
    %1318 = sbr.rel (0) target = $region41
  $region40: #{lstm_model_forward.1} parent=0 // pred_region
    _
  $region41: #{lstm_model_forward.1} parent=0 // pred_fallthru
    _
  // Predicated region
  $region42: #{lstm_model_forward.1} parent=0 // pred_check
    _
  $region43: #{lstm_model_forward.1} parent=0 // pred_check_branch
    %1320 = sbr.rel (0) target = $region45
  $region44: #{lstm_model_forward.1} parent=0 // pred_region
    _
  $region45: #{lstm_model_forward.1} parent=0 // pred_fallthru
    _

</llo_original>
